<compile_context>
chip_gen: v7x
topology: tpu7x:2x2x1
jax: 0.10.0
libtpu: 0.0.40
codegen_flags: <defaults>
</compile_context>

<pallas_src>
import functools

import jax
import jax.numpy as jnp
from jax.experimental import pallas as pl
from jax.experimental.pallas import tpu as pltpu


def _fused_mlp_kernel(x_ref, w1_ref, b1_ref, w2_ref, b2_ref, w3_ref, b3_ref,
                      o_ref, *, tile_b, compute_dtype):
    """Fused forward for one batch tile.

    x_ref : (tile_b*64, 64) compute_dtype, rows = (batch-in-tile, spatial-row)
    w1    : (64, 256)  compute_dtype      b1 : (1, 256) f32
    w2    : (256, 256) compute_dtype      b2 : (1, 256) f32
    w3    : (2, 64, 256) f32, lane-dense head weight: w3[c, r, d] == W3[r*256+d, c]
    b3    : (1, 2) f32
    o_ref : (tile_b, 2) f32
    """
    # Layer 1 + ReLU (MXU, f32 accumulation; operands already compute_dtype).
    h = jnp.dot(x_ref[...], w1_ref[...], preferred_element_type=jnp.float32)
    h = jnp.maximum(h + b1_ref[...], 0.0)

    # Layer 2 + ReLU (dominant FLOPs; bf16 operands, f32 accumulation).
    h = jnp.dot(h.astype(compute_dtype), w2_ref[...],
                preferred_element_type=jnp.float32)
    h = jnp.maximum(h + b2_ref[...], 0.0)              # (tile_b*64, 256) f32

    # Head: flatten(start_dim=1) + Linear(16384, 2), fused on the VMEM-resident
    # activations, one output channel at a time. No 4-D broadcast product:
    # each per-channel product is the same size as h and is reduced immediately.
    g = h.reshape(tile_b, 64, 256)   # clean layout cast (64 % 8 == 0, 256 % 128 == 0)

    def head_channel(c):
        prod = g * w3_ref[c][None, :, :]               # (tile_b, 64, 256) f32
        # Reduce the 64 rows-per-batch first (vreg adds + sublane reduce), then
        # the 256 lanes: far cheaper than a lane-first cross-lane reduction.
        s = jnp.sum(prod, axis=1)                      # (tile_b, 256)
        return jnp.sum(s, axis=1, keepdims=True)       # (tile_b, 1)

    o_ref[:, 0:1] = head_channel(0) + b3_ref[:, 0:1]
    o_ref[:, 1:2] = head_channel(1) + b3_ref[:, 1:2]


def _pick_batch_tile(batch):
    """Choose (batch_tile, padded_batch).

    - batch >= 128: fixed 64-batch tile (4096x64 rows per grid step) so the
      ~0.35us per-grid-step overhead is amortised while per-step VMEM stays
      well inside v7x's 64 MiB; guarantees >= 2 tiles for the 2-TC split.
    - smaller batches: largest sublane-aligned tile that still yields >= 2
      grid steps (when possible).
    - batches that don't divide the tile are padded (output sliced afterwards)
      instead of becoming one giant tile (avoids VMEM OOM for large odd B).
    """
    if batch >= 128:
        tile_b = 64
    else:
        tile_b = 8
        for cand in (32, 16):
            if batch >= 2 * cand:
                tile_b = cand
                break
    padded = pl.cdiv(batch, tile_b) * tile_b
    return tile_b, padded


def model_forward(x, params, *, compute_dtype=jnp.bfloat16):
    """x: (B, 1, 64, 64) float32 -> (B, 2) float32.

    compute_dtype selects the MXU operand dtype for the two big matmuls
    (bfloat16 by default; accumulation is always float32, biases/ReLU/head are
    float32). Pass jnp.float32 for strict PyTorch-float32 semantics.
    """
    w1, b1, w2, b2, w3, b3 = params
    B = x.shape[0]
    assert x.shape[1:] == (1, 64, 64), x.shape

    tile_b, padded_B = _pick_batch_tile(B)
    num_tiles = padded_B // tile_b
    rows = tile_b * 64

    # Layout glue (outside the kernel):
    #   (B,1,64,64) -> (B*64, 64): the two linears act on the last (W=64) axis.
    x2d = x.reshape(B * 64, 64)
    if padded_B != B:
        x2d = jnp.pad(x2d, ((0, (padded_B - B) * 64), (0, 0)))
    # x is the only operand streamed from HBM each step; stream it (and store
    # the resident matmul weights) in compute_dtype.
    x2d = x2d.astype(compute_dtype)
    w1c = w1.astype(compute_dtype)
    w2c = w2.astype(compute_dtype)
    #   (16384, 2) -> (2, 64, 256): lane-dense head weight (flatten idx = r*256+d).
    w3t = jnp.transpose(w3.reshape(64, 256, 2), (2, 0, 1)).astype(jnp.float32)

    kernel = functools.partial(
        _fused_mlp_kernel, tile_b=tile_b, compute_dtype=compute_dtype)

    itemsize = jnp.dtype(compute_dtype).itemsize
    cost = pl.CostEstimate(
        flops=(2 * padded_B * 64 * (64 * 256 + 256 * 256)   # two MXU matmuls
               + 2 * padded_B * 2 * 64 * 256),               # head multiply-reduce
        transcendentals=0,
        bytes_accessed=(padded_B * 64 * 64 * itemsize        # streamed x
                        + (64 * 256 + 256 * 256) * itemsize  # resident w1, w2
                        + (2 * 64 * 256 + 2 * 256 + 2) * 4   # w3 + biases (f32)
                        + padded_B * 2 * 4))                 # output

    out = pl.pallas_call(
        kernel,
        out_shape=jax.ShapeDtypeStruct((padded_B, 2), jnp.float32),
        grid=(num_tiles,),
        in_specs=[
            pl.BlockSpec((rows, 64), lambda i: (i, 0)),       # x tile (streamed / double-buffered)
            pl.BlockSpec((64, 256), lambda i: (0, 0)),        # w1 (VMEM-resident)
            pl.BlockSpec((1, 256), lambda i: (0, 0)),         # b1
            pl.BlockSpec((256, 256), lambda i: (0, 0)),       # w2 (VMEM-resident)
            pl.BlockSpec((1, 256), lambda i: (0, 0)),         # b2
            pl.BlockSpec((2, 64, 256), lambda i: (0, 0, 0)),  # w3 (lane-dense, resident)
            pl.BlockSpec((1, 2), lambda i: (0, 0)),           # b3
        ],
        # (tile_b, 2) output block: lane-sparse but tiny; kept streamed so the
        # batch-tile axis stays "parallel" (v7x 2-TC split).
        out_specs=pl.BlockSpec((tile_b, 2), lambda i: (i, 0)),
        compiler_params=pltpu.CompilerParams(
            dimension_semantics=("parallel",),
            vmem_limit_bytes=48 * 1024 * 1024,
        ),
        cost_estimate=cost,
    )(x2d, w1c, b1.reshape(1, 256), w2c, b2.reshape(1, 256), w3t,
      b3.reshape(1, 2))

    return out[:B] if padded_B != B else out


def init_params(key):
    """Deterministic init mirroring torch.nn.Linear (uniform +/-1/sqrt(fan_in)).
    Weights stored as (in_features, out_features)."""
    ks = jax.random.split(key, 6)

    def lin(kw, kb, fan_in, fan_out):
        bound = 1.0 / jnp.sqrt(fan_in)
        w = jax.random.uniform(kw, (fan_in, fan_out), jnp.float32, -bound, bound)
        b = jax.random.uniform(kb, (fan_out,), jnp.float32, -bound, bound)
        return w, b

    w1, b1 = lin(ks[0], ks[1], 64, 256)
    w2, b2 = lin(ks[2], ks[3], 256, 256)
    w3, b3 = lin(ks[4], ks[5], 64 * 256, 2)
    return (w1, b1, w2, b2, w3, b3)


def reference_forward(x, params):
    """Pure-JAX reference of the PyTorch forward (highest precision matmuls)."""
    w1, b1, w2, b2, w3, b3 = params
    hp = jax.lax.Precision.HIGHEST
    buf = jnp.maximum(jnp.dot(x, w1, precision=hp) + b1, 0.0)    # (B,1,64,256)
    buf = jnp.maximum(jnp.dot(buf, w2, precision=hp) + b2, 0.0)  # (B,1,64,256)
    buf = buf.reshape(x.shape[0], -1)                            # (B,16384)
    return jnp.dot(buf, w3, precision=hp) + b3                   # (B,2)


if __name__ == "__main__":
    key = jax.random.PRNGKey(0)
    k_x, k_p, k_x2 = jax.random.split(key, 3)

    params = init_params(k_p)

    fwd_bf16 = jax.jit(model_forward)                                   # default: bf16 matmuls
    fwd_f32 = jax.jit(functools.partial(model_forward, compute_dtype=jnp.float32))

    # Small input consistent with the module: (B,1,64,64). B=2 exercises the
    # pad-to-tile fallback (padded to one tile of 8 batch elements).
    B = 2
    x = jax.random.uniform(k_x, (B, 1, 64, 64), jnp.float32)
    ref = reference_forward(x, params)

    out = jax.block_until_ready(fwd_bf16(x, params))
    assert out.shape == (B, 2), out.shape
    # bf16 matmul operands with f32 accumulation: documented loose tolerance.
    assert jnp.allclose(out, ref, atol=3e-2, rtol=3e-2), (out, ref)

    out32 = jax.block_until_ready(fwd_f32(x, params))
    assert jnp.allclose(out32, ref, atol=1e-3, rtol=1e-3), (out32, ref)

    # Multi-tile path: B=32 -> two tiles of 16 ("parallel" grid axis, resident weights).
    B2 = 32
    x2 = jax.random.uniform(k_x2, (B2, 1, 64, 64), jnp.float32)
    ref2 = reference_forward(x2, params)
    out2 = jax.block_until_ready(fwd_bf16(x2, params))
    assert out2.shape == (B2, 2), out2.shape
    assert jnp.allclose(out2, ref2, atol=3e-2, rtol=3e-2), (out2, ref2)

    print("KERNEL_OK")
</pallas_src>

<mosaic_0001>
module attributes {stable_mosaic.version = 11 : i64} {
  func.func @_fused_mlp_kernel(%arg0: i32, %arg1: memref<512x64xbf16, #tpu.memory_space<vmem>>, %arg2: memref<64x256xbf16, #tpu.memory_space<vmem>>, %arg3: memref<1x256xf32, #tpu.memory_space<vmem>>, %arg4: memref<256x256xbf16, #tpu.memory_space<vmem>>, %arg5: memref<1x256xf32, #tpu.memory_space<vmem>>, %arg6: memref<2x64x256xf32, #tpu.memory_space<vmem>>, %arg7: memref<1x2xf32, #tpu.memory_space<vmem>>, %arg8: memref<8x2xf32, #tpu.memory_space<vmem>>) attributes {dimension_semantics = [#tpu.dimension_semantics<parallel>], iteration_bounds = array<i64: 1>, scalar_prefetch = 0 : i64, scratch_operands = 0 : i64, tpu.core_type = #tpu.core_type<tc>, window_params = [{transform_indices = @transform_0, window_bounds = array<i64: 512, 64>}, {pipeline_mode = #tpu.pipeline_mode<synchronous>, transform_indices = @transform_1, window_bounds = array<i64: 64, 256>}, {pipeline_mode = #tpu.pipeline_mode<synchronous>, transform_indices = @transform_2, window_bounds = array<i64: 1, 256>}, {pipeline_mode = #tpu.pipeline_mode<synchronous>, transform_indices = @transform_3, window_bounds = array<i64: 256, 256>}, {pipeline_mode = #tpu.pipeline_mode<synchronous>, transform_indices = @transform_4, window_bounds = array<i64: 1, 256>}, {pipeline_mode = #tpu.pipeline_mode<synchronous>, transform_indices = @transform_5, window_bounds = array<i64: 2, 64, 256>}, {pipeline_mode = #tpu.pipeline_mode<synchronous>, transform_indices = @transform_6, window_bounds = array<i64: 1, 2>}, {transform_indices = @transform_7, window_bounds = array<i64: 8, 2>}]} {
    %c0 = arith.constant 0 : index
    %c0_0 = arith.constant 0 : index
    %0 = vector.load %arg1[%c0, %c0_0] : memref<512x64xbf16, #tpu.memory_space<vmem>>, vector<512x64xbf16>
    %c0_1 = arith.constant 0 : index
    %c0_2 = arith.constant 0 : index
    %1 = vector.load %arg2[%c0_1, %c0_2] : memref<64x256xbf16, #tpu.memory_space<vmem>>, vector<64x256xbf16>
    %cst = arith.constant dense<0.000000e+00> : vector<512x256xf32>
    %2 = tpu.matmul %0, %1, %cst {dimension_numbers = #tpu.dot_dimension_numbers<[1], [0], [0], [1], [0, 0, 1, 1], [], []>} : vector<512x64xbf16>, vector<64x256xbf16>, vector<512x256xf32> -> vector<512x256xf32>
    %c0_3 = arith.constant 0 : index
    %c0_4 = arith.constant 0 : index
    %3 = vector.load %arg3[%c0_3, %c0_4] : memref<1x256xf32, #tpu.memory_space<vmem>>, vector<1x256xf32>
    %4 = vector.broadcast %3 : vector<1x256xf32> to vector<512x256xf32>
    %5 = arith.addf %2, %4 : vector<512x256xf32>
    %cst_5 = arith.constant 0.000000e+00 : f32
    %6 = vector.broadcast %cst_5 : f32 to vector<512x256xf32>
    %7 = arith.maximumf %5, %6 : vector<512x256xf32>
    %8 = arith.truncf %7 : vector<512x256xf32> to vector<512x256xbf16>
    %c0_6 = arith.constant 0 : index
    %c0_7 = arith.constant 0 : index
    %9 = vector.load %arg4[%c0_6, %c0_7] : memref<256x256xbf16, #tpu.memory_space<vmem>>, vector<256x256xbf16>
    %cst_8 = arith.constant dense<0.000000e+00> : vector<512x256xf32>
    %10 = tpu.matmul %8, %9, %cst_8 {dimension_numbers = #tpu.dot_dimension_numbers<[1], [0], [0], [1], [0, 0, 1, 1], [], []>} : vector<512x256xbf16>, vector<256x256xbf16>, vector<512x256xf32> -> vector<512x256xf32>
    %c0_9 = arith.constant 0 : index
    %c0_10 = arith.constant 0 : index
    %11 = vector.load %arg5[%c0_9, %c0_10] : memref<1x256xf32, #tpu.memory_space<vmem>>, vector<1x256xf32>
    %12 = vector.broadcast %11 : vector<1x256xf32> to vector<512x256xf32>
    %13 = arith.addf %10, %12 : vector<512x256xf32>
    %cst_11 = arith.constant 0.000000e+00 : f32
    %14 = vector.broadcast %cst_11 : f32 to vector<512x256xf32>
    %15 = arith.maximumf %13, %14 : vector<512x256xf32>
    %16 = vector.shape_cast %15 : vector<512x256xf32> to vector<8x64x256xf32>
    %c0_12 = arith.constant 0 : index
    %c0_13 = arith.constant 0 : index
    %c0_14 = arith.constant 0 : index
    %17 = vector.load %arg6[%c0_12, %c0_13, %c0_14] : memref<2x64x256xf32, #tpu.memory_space<vmem>>, vector<1x64x256xf32>
    %18 = vector.shape_cast %17 : vector<1x64x256xf32> to vector<64x256xf32>
    %19 = vector.shape_cast %18 : vector<64x256xf32> to vector<1x64x256xf32>
    %20 = vector.broadcast %19 : vector<1x64x256xf32> to vector<8x64x256xf32>
    %21 = arith.mulf %16, %20 : vector<8x64x256xf32>
    %cst_15 = arith.constant dense<0.000000e+00> : vector<8x256xf32>
    %22 = vector.multi_reduction <add>, %21, %cst_15 [1] : vector<8x64x256xf32> to vector<8x256xf32>
    %cst_16 = arith.constant dense<0.000000e+00> : vector<8xf32>
    %23 = vector.multi_reduction <add>, %22, %cst_16 [1] : vector<8x256xf32> to vector<8xf32>
    %24 = vector.shape_cast %23 : vector<8xf32> to vector<8x1xf32>
    %c0_17 = arith.constant 0 : index
    %c0_18 = arith.constant 0 : index
    %25 = vector.load %arg7[%c0_17, %c0_18] : memref<1x2xf32, #tpu.memory_space<vmem>>, vector<1x1xf32>
    %26 = vector.broadcast %25 : vector<1x1xf32> to vector<8x1xf32>
    %27 = arith.addf %24, %26 : vector<8x1xf32>
    %c0_19 = arith.constant 0 : index
    %c0_20 = arith.constant 0 : index
    %28 = vector.load %arg8[%c0_19, %c0_20] : memref<8x2xf32, #tpu.memory_space<vmem>>, vector<8x1xf32>
    tpu.vector_store %arg8[%c0_19, %c0_20], %27 {strides = array<i32>} : memref<8x2xf32, #tpu.memory_space<vmem>>, vector<8x1xf32>,
    %c1 = arith.constant 1 : index
    %c0_21 = arith.constant 0 : index
    %c0_22 = arith.constant 0 : index
    %29 = vector.load %arg6[%c1, %c0_21, %c0_22] : memref<2x64x256xf32, #tpu.memory_space<vmem>>, vector<1x64x256xf32>
    %30 = vector.shape_cast %29 : vector<1x64x256xf32> to vector<64x256xf32>
    %31 = vector.shape_cast %30 : vector<64x256xf32> to vector<1x64x256xf32>
    %32 = vector.broadcast %31 : vector<1x64x256xf32> to vector<8x64x256xf32>
    %33 = arith.mulf %16, %32 : vector<8x64x256xf32>
    %cst_23 = arith.constant dense<0.000000e+00> : vector<8x256xf32>
    %34 = vector.multi_reduction <add>, %33, %cst_23 [1] : vector<8x64x256xf32> to vector<8x256xf32>
    %cst_24 = arith.constant dense<0.000000e+00> : vector<8xf32>
    %35 = vector.multi_reduction <add>, %34, %cst_24 [1] : vector<8x256xf32> to vector<8xf32>
    %36 = vector.shape_cast %35 : vector<8xf32> to vector<8x1xf32>
    %c0_25 = arith.constant 0 : index
    %c1_26 = arith.constant 1 : index
    %37 = vector.load %arg7[%c0_25, %c1_26] : memref<1x2xf32, #tpu.memory_space<vmem>>, vector<1x1xf32>
    %38 = vector.broadcast %37 : vector<1x1xf32> to vector<8x1xf32>
    %39 = arith.addf %36, %38 : vector<8x1xf32>
    %c0_27 = arith.constant 0 : index
    %c1_28 = arith.constant 1 : index
    %40 = vector.load %arg8[%c0_27, %c1_28] : memref<8x2xf32, #tpu.memory_space<vmem>>, vector<8x1xf32>
    tpu.vector_store %arg8[%c0_27, %c1_28], %39 {strides = array<i32>} : memref<8x2xf32, #tpu.memory_space<vmem>>, vector<8x1xf32>,
    return
  }
  func.func @transform_0(%arg0: i32) -> (i32, i32) {
    %c0_i32 = arith.constant 0 : i32
    %c0_i32_0 = arith.constant 0 : i32
    return %arg0, %c0_i32 : i32, i32
  }
  func.func @transform_1(%arg0: i32) -> (i32, i32) {
    %c0_i32 = arith.constant 0 : i32
    %c0_i32_0 = arith.constant 0 : i32
    %c0_i32_1 = arith.constant 0 : i32
    return %c0_i32, %c0_i32_0 : i32, i32
  }
  func.func @transform_2(%arg0: i32) -> (i32, i32) {
    %c0_i32 = arith.constant 0 : i32
    %c0_i32_0 = arith.constant 0 : i32
    %c0_i32_1 = arith.constant 0 : i32
    return %c0_i32, %c0_i32_0 : i32, i32
  }
  func.func @transform_3(%arg0: i32) -> (i32, i32) {
    %c0_i32 = arith.constant 0 : i32
    %c0_i32_0 = arith.constant 0 : i32
    %c0_i32_1 = arith.constant 0 : i32
    return %c0_i32, %c0_i32_0 : i32, i32
  }
  func.func @transform_4(%arg0: i32) -> (i32, i32) {
    %c0_i32 = arith.constant 0 : i32
    %c0_i32_0 = arith.constant 0 : i32
    %c0_i32_1 = arith.constant 0 : i32
    return %c0_i32, %c0_i32_0 : i32, i32
  }
  func.func @transform_5(%arg0: i32) -> (i32, i32, i32) {
    %c0_i32 = arith.constant 0 : i32
    %c0_i32_0 = arith.constant 0 : i32
    %c0_i32_1 = arith.constant 0 : i32
    %c0_i32_2 = arith.constant 0 : i32
    return %c0_i32, %c0_i32_0, %c0_i32_1 : i32, i32, i32
  }
  func.func @transform_6(%arg0: i32) -> (i32, i32) {
    %c0_i32 = arith.constant 0 : i32
    %c0_i32_0 = arith.constant 0 : i32
    %c0_i32_1 = arith.constant 0 : i32
    return %c0_i32, %c0_i32_0 : i32, i32
  }
  func.func @transform_7(%arg0: i32) -> (i32, i32) {
    %c0_i32 = arith.constant 0 : i32
    %c0_i32_0 = arith.constant 0 : i32
    return %arg0, %c0_i32 : i32, i32
  }
}

</mosaic_0001>

<llo_original>
// kernel: model_forward.1
$region0: #{model_forward.1}
  #allocation0 [shape = 'u32[]', space=smem, size = 0x4, offset = 0x4, fixed_abs, tag = 'smem constant byte address 0x4 - core index']
  #allocation1 [shape = 'u32[144,128]{1,0:T(1,128)}', space=vmem, size = 0x12000, scoped, tag = 'internal scratch']
  %s0 = inlined_call_operand.vmem [shape: bf16[512,64], index: 0, kind: input, shape index: {}]
  %s1 = inlined_call_operand.vmem [shape: bf16[64,256], index: 1, kind: input, shape index: {}]
  %s2 = inlined_call_operand.vmem [shape: f32[1,256], index: 2, kind: input, shape index: {}]
  %s3 = inlined_call_operand.vmem [shape: bf16[256,256], index: 3, kind: input, shape index: {}]
  %s4 = inlined_call_operand.vmem [shape: f32[1,256], index: 4, kind: input, shape index: {}]
  %s5 = inlined_call_operand.vmem [shape: f32[2,64,256], index: 5, kind: input, shape index: {}]
  %s6 = inlined_call_operand.vmem [shape: f32[1,2], index: 6, kind: input, shape index: {}]
  %s7 = inlined_call_operand.vmem [shape: f32[8,2], index: 7, kind: output, shape index: {}]
  %s8 = sld [smem:[#allocation0]]
  $region38: #{model_forward.1} parent=0
    _
  %s10 = ssub.s32 1, %s8
  %s11 = scalar_select 0, %s10, %s8
  // Predicated region
  $region2: #{model_forward.1} parent=0 // pred_check
    _
  $region3: #{model_forward.1} parent=0 // pred_check_branch
    %13 = sbr.rel (0) target = $region5
  $region4: #{model_forward.1} parent=0 // pred_region
    _
  $region5: #{model_forward.1} parent=0 // pred_fallthru
    _
  // Predicated region
  $region6: #{model_forward.1} parent=0 // pred_check
    _
  $region7: #{model_forward.1} parent=0 // pred_check_branch
    %15 = sbr.rel (0) target = $region9
  $region8: #{model_forward.1} parent=0 // pred_region
    _
  $region9: #{model_forward.1} parent=0 // pred_fallthru
    _
  // Predicated region
  $region10: #{model_forward.1} parent=0 // pred_check
    _
  $region11: #{model_forward.1} parent=0 // pred_check_branch
    %17 = sbr.rel (0) target = $region13
  $region12: #{model_forward.1} parent=0 // pred_region
    _
  $region13: #{model_forward.1} parent=0 // pred_fallthru
    _
  // Predicated region
  $region14: #{model_forward.1} parent=0 // pred_check
    _
  $region15: #{model_forward.1} parent=0 // pred_check_branch
    %19 = sbr.rel (0) target = $region17
  $region16: #{model_forward.1} parent=0 // pred_region
    _
  $region17: #{model_forward.1} parent=0 // pred_fallthru
    _
  // Predicated region
  $region18: #{model_forward.1} parent=0 // pred_check
    _
  $region19: #{model_forward.1} parent=0 // pred_check_branch
    %21 = sbr.rel (0) target = $region21
  $region20: #{model_forward.1} parent=0 // pred_region
    _
  $region21: #{model_forward.1} parent=0 // pred_fallthru
    _
  // Predicated region
  $region22: #{model_forward.1} parent=0 // pred_check
    _
  $region23: #{model_forward.1} parent=0 // pred_check_branch
    %23 = sbr.rel (0) target = $region25
  $region24: #{model_forward.1} parent=0 // pred_region
    _
  $region25: #{model_forward.1} parent=0 // pred_fallthru
    _
  // Predicated region
  $region26: #{model_forward.1} parent=0 // pred_check
    _
  $region27: #{model_forward.1} parent=0 // pred_check_branch
    %25 = sbr.rel (0) target = $region29
  $region28: #{model_forward.1} parent=0 // pred_region
    _
  $region29: #{model_forward.1} parent=0 // pred_fallthru
    _
  %v27 = vld [vmem:[%s0] sm:$0xf]
  %v28 = vld [vmem:[%s0 + $0x4] sm:$0xf]
  %v29 = vld [vmem:[%s0 + $0x8] sm:$0xf]
  %v30 = vld [vmem:[%s0 + $0xc] sm:$0xf]
  %v31 = vld [vmem:[%s0 + $0x10] sm:$0xf]
  %v32 = vld [vmem:[%s0 + $0x14] sm:$0xf]
  %v33 = vld [vmem:[%s0 + $0x18] sm:$0xf]
  %v34 = vld [vmem:[%s0 + $0x1c] sm:$0xf]
  %v35 = vld [vmem:[%s0 + $0x20] sm:$0xf]
  %v36 = vld [vmem:[%s0 + $0x24] sm:$0xf]
  %v37 = vld [vmem:[%s0 + $0x28] sm:$0xf]
  %v38 = vld [vmem:[%s0 + $0x2c] sm:$0xf]
  %v39 = vld [vmem:[%s0 + $0x30] sm:$0xf]
  %v40 = vld [vmem:[%s0 + $0x34] sm:$0xf]
  %v41 = vld [vmem:[%s0 + $0x38] sm:$0xf]
  %v42 = vld [vmem:[%s0 + $0x3c] sm:$0xf]
  %v43 = vld [vmem:[%s0 + $0x40] sm:$0xf]
  %v44 = vld [vmem:[%s0 + $0x44] sm:$0xf]
  %v45 = vld [vmem:[%s0 + $0x48] sm:$0xf]
  %v46 = vld [vmem:[%s0 + $0x4c] sm:$0xf]
  %v47 = vld [vmem:[%s0 + $0x50] sm:$0xf]
  %v48 = vld [vmem:[%s0 + $0x54] sm:$0xf]
  %v49 = vld [vmem:[%s0 + $0x58] sm:$0xf]
  %v50 = vld [vmem:[%s0 + $0x5c] sm:$0xf]
  %v51 = vld [vmem:[%s0 + $0x60] sm:$0xf]
  %v52 = vld [vmem:[%s0 + $0x64] sm:$0xf]
  %v53 = vld [vmem:[%s0 + $0x68] sm:$0xf]
  %v54 = vld [vmem:[%s0 + $0x6c] sm:$0xf]
  %v55 = vld [vmem:[%s0 + $0x70] sm:$0xf]
  %v56 = vld [vmem:[%s0 + $0x74] sm:$0xf]
  %v57 = vld [vmem:[%s0 + $0x78] sm:$0xf]
  %v58 = vld [vmem:[%s0 + $0x7c] sm:$0xf]
  %v59 = vld [vmem:[%s0 + $0x80] sm:$0xf]
  %v60 = vld [vmem:[%s0 + $0x84] sm:$0xf]
  %v61 = vld [vmem:[%s0 + $0x88] sm:$0xf]
  %v62 = vld [vmem:[%s0 + $0x8c] sm:$0xf]
  %v63 = vld [vmem:[%s0 + $0x90] sm:$0xf]
  %v64 = vld [vmem:[%s0 + $0x94] sm:$0xf]
  %v65 = vld [vmem:[%s0 + $0x98] sm:$0xf]
  %v66 = vld [vmem:[%s0 + $0x9c] sm:$0xf]
  %v67 = vld [vmem:[%s0 + $0xa0] sm:$0xf]
  %v68 = vld [vmem:[%s0 + $0xa4] sm:$0xf]
  %v69 = vld [vmem:[%s0 + $0xa8] sm:$0xf]
  %v70 = vld [vmem:[%s0 + $0xac] sm:$0xf]
  %v71 = vld [vmem:[%s0 + $0xb0] sm:$0xf]
  %v72 = vld [vmem:[%s0 + $0xb4] sm:$0xf]
  %v73 = vld [vmem:[%s0 + $0xb8] sm:$0xf]
  %v74 = vld [vmem:[%s0 + $0xbc] sm:$0xf]
  %v75 = vld [vmem:[%s0 + $0xc0] sm:$0xf]
  %v76 = vld [vmem:[%s0 + $0xc4] sm:$0xf]
  %v77 = vld [vmem:[%s0 + $0xc8] sm:$0xf]
  %v78 = vld [vmem:[%s0 + $0xcc] sm:$0xf]
  %v79 = vld [vmem:[%s0 + $0xd0] sm:$0xf]
  %v80 = vld [vmem:[%s0 + $0xd4] sm:$0xf]
  %v81 = vld [vmem:[%s0 + $0xd8] sm:$0xf]
  %v82 = vld [vmem:[%s0 + $0xdc] sm:$0xf]
  %v83 = vld [vmem:[%s0 + $0xe0] sm:$0xf]
  %v84 = vld [vmem:[%s0 + $0xe4] sm:$0xf]
  %v85 = vld [vmem:[%s0 + $0xe8] sm:$0xf]
  %v86 = vld [vmem:[%s0 + $0xec] sm:$0xf]
  %v87 = vld [vmem:[%s0 + $0xf0] sm:$0xf]
  %v88 = vld [vmem:[%s0 + $0xf4] sm:$0xf]
  %v89 = vld [vmem:[%s0 + $0xf8] sm:$0xf]
  %v90 = vld [vmem:[%s0 + $0xfc] sm:$0xf]
  %v91 = vld [vmem:[%s1] sm:$0xff]
  %v92 = vld [vmem:[%s1 + $0x8] sm:$0xff]
  %v93 = vld [vmem:[%s1 + $0x10] sm:$0xff]
  %v94 = vld [vmem:[%s1 + $0x18] sm:$0xff]
  %v95 = vld [vmem:[%s1 + $0x20] sm:$0xff]
  %v96 = vld [vmem:[%s1 + $0x28] sm:$0xff]
  %v97 = vld [vmem:[%s1 + $0x30] sm:$0xff]
  %v98 = vld [vmem:[%s1 + $0x38] sm:$0xff]
  %v99 = vld [vmem:[%s2] sm:$0x3]
  %v101 = vlaneseq
  %v102 = vshrl.u32 %v101, 7
  %v103 = vsub.s32 0, %v102
  %v104 = vrot.slane %v99, %v103
  %v105 = vlaneseq
  %v106 = vshrl.u32 %v105, 7
  %v107 = vsub.s32 1, %v106
  %v108 = vrot.slane %v99, %v107
  %v175 = vunpack.c.l.b16 %v27
  %v176 = vunpack.c.l.b16 %v28
  %v177 = vunpack.c.l.b16 %v29
  %v178 = vunpack.c.l.b16 %v30
  %v179 = vunpack.c.l.b16 %v31
  %v180 = vunpack.c.l.b16 %v32
  %v181 = vunpack.c.l.b16 %v33
  %v182 = vunpack.c.l.b16 %v34
  %v183 = vunpack.c.l.b16 %v35
  %v184 = vunpack.c.l.b16 %v36
  %v185 = vunpack.c.l.b16 %v37
  %v186 = vunpack.c.l.b16 %v38
  %v187 = vunpack.c.l.b16 %v39
  %v188 = vunpack.c.l.b16 %v40
  %v189 = vunpack.c.l.b16 %v41
  %v190 = vunpack.c.l.b16 %v42
  %v191 = vunpack.c.l.b16 %v43
  %v192 = vunpack.c.l.b16 %v44
  %v193 = vunpack.c.l.b16 %v45
  %v194 = vunpack.c.l.b16 %v46
  %v195 = vunpack.c.l.b16 %v47
  %v196 = vunpack.c.l.b16 %v48
  %v197 = vunpack.c.l.b16 %v49
  %v198 = vunpack.c.l.b16 %v50
  %v199 = vunpack.c.l.b16 %v51
  %v200 = vunpack.c.l.b16 %v52
  %v201 = vunpack.c.l.b16 %v53
  %v202 = vunpack.c.l.b16 %v54
  %v203 = vunpack.c.l.b16 %v55
  %v204 = vunpack.c.l.b16 %v56
  %v205 = vunpack.c.l.b16 %v57
  %v206 = vunpack.c.l.b16 %v58
  %v207 = vunpack.c.l.b16 %v59
  %v208 = vunpack.c.l.b16 %v60
  %v209 = vunpack.c.l.b16 %v61
  %v210 = vunpack.c.l.b16 %v62
  %v211 = vunpack.c.l.b16 %v63
  %v212 = vunpack.c.l.b16 %v64
  %v213 = vunpack.c.l.b16 %v65
  %v214 = vunpack.c.l.b16 %v66
  %v215 = vunpack.c.l.b16 %v67
  %v216 = vunpack.c.l.b16 %v68
  %v217 = vunpack.c.l.b16 %v69
  %v218 = vunpack.c.l.b16 %v70
  %v219 = vunpack.c.l.b16 %v71
  %v220 = vunpack.c.l.b16 %v72
  %v221 = vunpack.c.l.b16 %v73
  %v222 = vunpack.c.l.b16 %v74
  %v223 = vunpack.c.l.b16 %v75
  %v224 = vunpack.c.l.b16 %v76
  %v225 = vunpack.c.l.b16 %v77
  %v226 = vunpack.c.l.b16 %v78
  %v227 = vunpack.c.l.b16 %v79
  %v228 = vunpack.c.l.b16 %v80
  %v229 = vunpack.c.l.b16 %v81
  %v230 = vunpack.c.l.b16 %v82
  %v231 = vunpack.c.l.b16 %v83
  %v232 = vunpack.c.l.b16 %v84
  %v233 = vunpack.c.l.b16 %v85
  %v234 = vunpack.c.l.b16 %v86
  %v235 = vunpack.c.l.b16 %v87
  %v236 = vunpack.c.l.b16 %v88
  %v237 = vunpack.c.l.b16 %v89
  %v238 = vunpack.c.l.b16 %v90
  %v239 = vpack.c.b16 %v176, %v175
  %v240 = vpack.c.b16 %v178, %v177
  %v241 = vpack.c.b16 %v180, %v179
  %v242 = vpack.c.b16 %v182, %v181
  %v243 = vpack.c.b16 %v184, %v183
  %v244 = vpack.c.b16 %v186, %v185
  %v245 = vpack.c.b16 %v188, %v187
  %v246 = vpack.c.b16 %v190, %v189
  %v247 = vpack.c.b16 %v192, %v191
  %v248 = vpack.c.b16 %v194, %v193
  %v249 = vpack.c.b16 %v196, %v195
  %v250 = vpack.c.b16 %v198, %v197
  %v251 = vpack.c.b16 %v200, %v199
  %v252 = vpack.c.b16 %v202, %v201
  %v253 = vpack.c.b16 %v204, %v203
  %v254 = vpack.c.b16 %v206, %v205
  %v255 = vpack.c.b16 %v208, %v207
  %v256 = vpack.c.b16 %v210, %v209
  %v257 = vpack.c.b16 %v212, %v211
  %v258 = vpack.c.b16 %v214, %v213
  %v259 = vpack.c.b16 %v216, %v215
  %v260 = vpack.c.b16 %v218, %v217
  %v261 = vpack.c.b16 %v220, %v219
  %v262 = vpack.c.b16 %v222, %v221
  %v263 = vpack.c.b16 %v224, %v223
  %v264 = vpack.c.b16 %v226, %v225
  %v265 = vpack.c.b16 %v228, %v227
  %v266 = vpack.c.b16 %v230, %v229
  %v267 = vpack.c.b16 %v232, %v231
  %v268 = vpack.c.b16 %v234, %v233
  %v269 = vpack.c.b16 %v236, %v235
  %v270 = vpack.c.b16 %v238, %v237
  %v279 = vunpack.c.l.b16 %v91
  %v280 = vunpack.c.h.b16 %v91
  %v281 = vunpack.c.l.b16 %v92
  %v282 = vunpack.c.h.b16 %v92
  %v283 = vunpack.c.l.b16 %v93
  %v284 = vunpack.c.h.b16 %v93
  %v285 = vunpack.c.l.b16 %v94
  %v286 = vunpack.c.h.b16 %v94
  %v287 = vunpack.c.l.b16 %v95
  %v288 = vunpack.c.h.b16 %v95
  %v289 = vunpack.c.l.b16 %v96
  %v290 = vunpack.c.h.b16 %v96
  %v291 = vunpack.c.l.b16 %v97
  %v292 = vunpack.c.h.b16 %v97
  %v293 = vunpack.c.l.b16 %v98
  %v294 = vunpack.c.h.b16 %v98
  %v295 = vpack.c.b16 %v281, %v279
  %v296 = vpack.c.b16 %v282, %v280
  %v297 = vpack.c.b16 %v285, %v283
  %v298 = vpack.c.b16 %v286, %v284
  %v299 = vpack.c.b16 %v289, %v287
  %v300 = vpack.c.b16 %v290, %v288
  %v301 = vpack.c.b16 %v293, %v291
  %v302 = vpack.c.b16 %v294, %v292
  %vm311 = vcmask 523264
  %v313 = vsel %vm311, %v239, 0
  %v316 = vsel %vm311, %v240, 0
  %v319 = vsel %vm311, %v241, 0
  %v322 = vsel %vm311, %v242, 0
  %v325 = vsel %vm311, %v243, 0
  %v328 = vsel %vm311, %v244, 0
  %v331 = vsel %vm311, %v245, 0
  %v334 = vsel %vm311, %v246, 0
  %v337 = vsel %vm311, %v247, 0
  %v340 = vsel %vm311, %v248, 0
  %v343 = vsel %vm311, %v249, 0
  %v346 = vsel %vm311, %v250, 0
  %v349 = vsel %vm311, %v251, 0
  %v352 = vsel %vm311, %v252, 0
  %v355 = vsel %vm311, %v253, 0
  %v358 = vsel %vm311, %v254, 0
  %v361 = vsel %vm311, %v255, 0
  %v364 = vsel %vm311, %v256, 0
  %v367 = vsel %vm311, %v257, 0
  %v370 = vsel %vm311, %v258, 0
  %v373 = vsel %vm311, %v259, 0
  %v376 = vsel %vm311, %v260, 0
  %v379 = vsel %vm311, %v261, 0
  %v382 = vsel %vm311, %v262, 0
  %v385 = vsel %vm311, %v263, 0
  %v388 = vsel %vm311, %v264, 0
  %v391 = vsel %vm311, %v265, 0
  %v394 = vsel %vm311, %v266, 0
  %v397 = vsel %vm311, %v267, 0
  %v400 = vsel %vm311, %v268, 0
  %v403 = vsel %vm311, %v269, 0
  %v406 = vsel %vm311, %v270, 0
  %408 = vmatprep.subr.bf16.mxu0 %v296
  %409 = vmatpush1.bf16.msra.mxu0 %v295
  %410 = vmatprep.subr.bf16.mxu0 %v298
  %411 = vmatpush1.bf16.msra.mxu0 %v297
  %412 = vmatprep.subr.bf16.mxu0 %v300
  %413 = vmatpush1.bf16.msra.mxu0 %v299
  %414 = vmatprep.subr.bf16.mxu0 %v302
  %415 = vmatpush1.bf16.msra.mxu0 %v301
  %416 = vmatprep.subr.bf16.mxu0 0
  %417 = vmatpush1.bf16.msra.mxu0 0
  %418 = vmatprep.subr.bf16.mxu0 0
  %419 = vmatpush1.bf16.msra.mxu0 0
  %420 = vmatprep.subr.bf16.mxu0 0
  %421 = vmatpush1.bf16.msra.mxu0 0
  %422 = vmatprep.subr.bf16.mxu0 0
  %423 = vmatpush1.bf16.msra.mxu0 0
  %424 = vmatprep.subr.bf16.mxu0 0
  %425 = vmatpush1.bf16.msra.mxu0 0
  %426 = vmatprep.subr.bf16.mxu0 0
  %427 = vmatpush1.bf16.msra.mxu0 0
  %428 = vmatprep.subr.bf16.mxu0 0
  %429 = vmatpush1.bf16.msra.mxu0 0
  %430 = vmatprep.subr.bf16.mxu0 0
  %431 = vmatpush1.bf16.msra.mxu0 0
  %432 = vmatprep.subr.bf16.mxu0 0
  %433 = vmatpush1.bf16.msra.mxu0 0
  %434 = vmatprep.subr.bf16.mxu0 0
  %435 = vmatpush1.bf16.msra.mxu0 0
  %436 = vmatprep.subr.bf16.mxu0 0
  %437 = vmatpush1.bf16.msra.mxu0 0
  %438 = vmatprep.subr.bf16.mxu0 0
  %439 = vmatpush1.bf16.msra.mxu0 0
  %440 = vmatprep.mubr.bf16.mxu0 0
  %441 = vmatmul.mubr.bf16.gmra.mrb[0].mxu0 %v313
  %v442 = vpop.f32.mrb[0].mxu0
  %v443 = vadd.f32 %v104, %v442
  %v444 = vpop.f32.mrb[0].mxu0
  %v445 = vadd.f32 %v108, %v444
  %v446 = vpop.f32.mrb[0].mxu0
  %v447 = vadd.f32 %v104, %v446
  %v448 = vpop.f32.mrb[0].mxu0
  %v449 = vadd.f32 %v108, %v448
  %450 = vmatprep.mubr.bf16.mxu0 0
  %451 = vmatmul.mubr.bf16.gmra.mrb[0].mxu0 %v316
  %v452 = vpop.f32.mrb[0].mxu0
  %v453 = vadd.f32 %v104, %v452
  %v454 = vpop.f32.mrb[0].mxu0
  %v455 = vadd.f32 %v108, %v454
  %v456 = vpop.f32.mrb[0].mxu0
  %v457 = vadd.f32 %v104, %v456
  %v458 = vpop.f32.mrb[0].mxu0
  %v459 = vadd.f32 %v108, %v458
  %460 = vmatprep.mubr.bf16.mxu0 0
  %461 = vmatmul.mubr.bf16.gmra.mrb[0].mxu0 %v319
  %v462 = vpop.f32.mrb[0].mxu0
  %v463 = vadd.f32 %v104, %v462
  %v464 = vpop.f32.mrb[0].mxu0
  %v465 = vadd.f32 %v108, %v464
  %v466 = vpop.f32.mrb[0].mxu0
  %v467 = vadd.f32 %v104, %v466
  %v468 = vpop.f32.mrb[0].mxu0
  %v469 = vadd.f32 %v108, %v468
  %470 = vmatprep.mubr.bf16.mxu0 0
  %471 = vmatmul.mubr.bf16.gmra.mrb[0].mxu0 %v322
  %v472 = vpop.f32.mrb[0].mxu0
  %v473 = vadd.f32 %v104, %v472
  %v474 = vpop.f32.mrb[0].mxu0
  %v475 = vadd.f32 %v108, %v474
  %v476 = vpop.f32.mrb[0].mxu0
  %v477 = vadd.f32 %v104, %v476
  %v478 = vpop.f32.mrb[0].mxu0
  %v479 = vadd.f32 %v108, %v478
  %480 = vmatprep.mubr.bf16.mxu0 0
  %481 = vmatmul.mubr.bf16.gmra.mrb[0].mxu0 %v325
  %v482 = vpop.f32.mrb[0].mxu0
  %v483 = vadd.f32 %v104, %v482
  %v484 = vpop.f32.mrb[0].mxu0
  %v485 = vadd.f32 %v108, %v484
  %v486 = vpop.f32.mrb[0].mxu0
  %v487 = vadd.f32 %v104, %v486
  %v488 = vpop.f32.mrb[0].mxu0
  %v489 = vadd.f32 %v108, %v488
  %490 = vmatprep.mubr.bf16.mxu0 0
  %491 = vmatmul.mubr.bf16.gmra.mrb[0].mxu0 %v328
  %v492 = vpop.f32.mrb[0].mxu0
  %v493 = vadd.f32 %v104, %v492
  %v494 = vpop.f32.mrb[0].mxu0
  %v495 = vadd.f32 %v108, %v494
  %v496 = vpop.f32.mrb[0].mxu0
  %v497 = vadd.f32 %v104, %v496
  %v498 = vpop.f32.mrb[0].mxu0
  %v499 = vadd.f32 %v108, %v498
  %500 = vmatprep.mubr.bf16.mxu0 0
  %501 = vmatmul.mubr.bf16.gmra.mrb[0].mxu0 %v331
  %v502 = vpop.f32.mrb[0].mxu0
  %v503 = vadd.f32 %v104, %v502
  %v504 = vpop.f32.mrb[0].mxu0
  %v505 = vadd.f32 %v108, %v504
  %v506 = vpop.f32.mrb[0].mxu0
  %v507 = vadd.f32 %v104, %v506
  %v508 = vpop.f32.mrb[0].mxu0
  %v509 = vadd.f32 %v108, %v508
  %510 = vmatprep.mubr.bf16.mxu0 0
  %511 = vmatmul.mubr.bf16.gmra.mrb[0].mxu0 %v334
  %v512 = vpop.f32.mrb[0].mxu0
  %v513 = vadd.f32 %v104, %v512
  %v514 = vpop.f32.mrb[0].mxu0
  %v515 = vadd.f32 %v108, %v514
  %v516 = vpop.f32.mrb[0].mxu0
  %v517 = vadd.f32 %v104, %v516
  %v518 = vpop.f32.mrb[0].mxu0
  %v519 = vadd.f32 %v108, %v518
  %520 = vmatprep.mubr.bf16.mxu0 0
  %521 = vmatmul.mubr.bf16.gmra.mrb[0].mxu0 %v337
  %v522 = vpop.f32.mrb[0].mxu0
  %v523 = vadd.f32 %v104, %v522
  %v524 = vpop.f32.mrb[0].mxu0
  %v525 = vadd.f32 %v108, %v524
  %v526 = vpop.f32.mrb[0].mxu0
  %v527 = vadd.f32 %v104, %v526
  %v528 = vpop.f32.mrb[0].mxu0
  %v529 = vadd.f32 %v108, %v528
  %530 = vmatprep.mubr.bf16.mxu0 0
  %531 = vmatmul.mubr.bf16.gmra.mrb[0].mxu0 %v340
  %v532 = vpop.f32.mrb[0].mxu0
  %v533 = vadd.f32 %v104, %v532
  %v534 = vpop.f32.mrb[0].mxu0
  %v535 = vadd.f32 %v108, %v534
  %v536 = vpop.f32.mrb[0].mxu0
  %v537 = vadd.f32 %v104, %v536
  %v538 = vpop.f32.mrb[0].mxu0
  %v539 = vadd.f32 %v108, %v538
  %540 = vmatprep.mubr.bf16.mxu0 0
  %541 = vmatmul.mubr.bf16.gmra.mrb[0].mxu0 %v343
  %v542 = vpop.f32.mrb[0].mxu0
  %v543 = vadd.f32 %v104, %v542
  %v544 = vpop.f32.mrb[0].mxu0
  %v545 = vadd.f32 %v108, %v544
  %v546 = vpop.f32.mrb[0].mxu0
  %v547 = vadd.f32 %v104, %v546
  %v548 = vpop.f32.mrb[0].mxu0
  %v549 = vadd.f32 %v108, %v548
  %550 = vmatprep.mubr.bf16.mxu0 0
  %551 = vmatmul.mubr.bf16.gmra.mrb[0].mxu0 %v346
  %v552 = vpop.f32.mrb[0].mxu0
  %v553 = vadd.f32 %v104, %v552
  %v554 = vpop.f32.mrb[0].mxu0
  %v555 = vadd.f32 %v108, %v554
  %v556 = vpop.f32.mrb[0].mxu0
  %v557 = vadd.f32 %v104, %v556
  %v558 = vpop.f32.mrb[0].mxu0
  %v559 = vadd.f32 %v108, %v558
  %560 = vmatprep.mubr.bf16.mxu0 0
  %561 = vmatmul.mubr.bf16.gmra.mrb[0].mxu0 %v349
  %v562 = vpop.f32.mrb[0].mxu0
  %v563 = vadd.f32 %v104, %v562
  %v564 = vpop.f32.mrb[0].mxu0
  %v565 = vadd.f32 %v108, %v564
  %v566 = vpop.f32.mrb[0].mxu0
  %v567 = vadd.f32 %v104, %v566
  %v568 = vpop.f32.mrb[0].mxu0
  %v569 = vadd.f32 %v108, %v568
  %570 = vmatprep.mubr.bf16.mxu0 0
  %571 = vmatmul.mubr.bf16.gmra.mrb[0].mxu0 %v352
  %v572 = vpop.f32.mrb[0].mxu0
  %v573 = vadd.f32 %v104, %v572
  %v574 = vpop.f32.mrb[0].mxu0
  %v575 = vadd.f32 %v108, %v574
  %v576 = vpop.f32.mrb[0].mxu0
  %v577 = vadd.f32 %v104, %v576
  %v578 = vpop.f32.mrb[0].mxu0
  %v579 = vadd.f32 %v108, %v578
  %580 = vmatprep.mubr.bf16.mxu0 0
  %581 = vmatmul.mubr.bf16.gmra.mrb[0].mxu0 %v355
  %v582 = vpop.f32.mrb[0].mxu0
  %v583 = vadd.f32 %v104, %v582
  %v584 = vpop.f32.mrb[0].mxu0
  %v585 = vadd.f32 %v108, %v584
  %v586 = vpop.f32.mrb[0].mxu0
  %v587 = vadd.f32 %v104, %v586
  %v588 = vpop.f32.mrb[0].mxu0
  %v589 = vadd.f32 %v108, %v588
  %590 = vmatprep.mubr.bf16.mxu0 0
  %591 = vmatmul.mubr.bf16.gmra.mrb[0].mxu0 %v358
  %v592 = vpop.f32.mrb[0].mxu0
  %v593 = vadd.f32 %v104, %v592
  %v594 = vpop.f32.mrb[0].mxu0
  %v595 = vadd.f32 %v108, %v594
  %v596 = vpop.f32.mrb[0].mxu0
  %v597 = vadd.f32 %v104, %v596
  %v598 = vpop.f32.mrb[0].mxu0
  %v599 = vadd.f32 %v108, %v598
  %600 = vmatprep.mubr.bf16.mxu0 0
  %601 = vmatmul.mubr.bf16.gmra.mrb[0].mxu0 %v361
  %v602 = vpop.f32.mrb[0].mxu0
  %v603 = vadd.f32 %v104, %v602
  %v604 = vpop.f32.mrb[0].mxu0
  %v605 = vadd.f32 %v108, %v604
  %v606 = vpop.f32.mrb[0].mxu0
  %v607 = vadd.f32 %v104, %v606
  %v608 = vpop.f32.mrb[0].mxu0
  %v609 = vadd.f32 %v108, %v608
  %610 = vmatprep.mubr.bf16.mxu0 0
  %611 = vmatmul.mubr.bf16.gmra.mrb[0].mxu0 %v364
  %v612 = vpop.f32.mrb[0].mxu0
  %v613 = vadd.f32 %v104, %v612
  %v614 = vpop.f32.mrb[0].mxu0
  %v615 = vadd.f32 %v108, %v614
  %v616 = vpop.f32.mrb[0].mxu0
  %v617 = vadd.f32 %v104, %v616
  %v618 = vpop.f32.mrb[0].mxu0
  %v619 = vadd.f32 %v108, %v618
  %620 = vmatprep.mubr.bf16.mxu0 0
  %621 = vmatmul.mubr.bf16.gmra.mrb[0].mxu0 %v367
  %v622 = vpop.f32.mrb[0].mxu0
  %v623 = vadd.f32 %v104, %v622
  %v624 = vpop.f32.mrb[0].mxu0
  %v625 = vadd.f32 %v108, %v624
  %v626 = vpop.f32.mrb[0].mxu0
  %v627 = vadd.f32 %v104, %v626
  %v628 = vpop.f32.mrb[0].mxu0
  %v629 = vadd.f32 %v108, %v628
  %630 = vmatprep.mubr.bf16.mxu0 0
  %631 = vmatmul.mubr.bf16.gmra.mrb[0].mxu0 %v370
  %v632 = vpop.f32.mrb[0].mxu0
  %v633 = vadd.f32 %v104, %v632
  %v634 = vpop.f32.mrb[0].mxu0
  %v635 = vadd.f32 %v108, %v634
  %v636 = vpop.f32.mrb[0].mxu0
  %v637 = vadd.f32 %v104, %v636
  %v638 = vpop.f32.mrb[0].mxu0
  %v639 = vadd.f32 %v108, %v638
  %640 = vmatprep.mubr.bf16.mxu0 0
  %641 = vmatmul.mubr.bf16.gmra.mrb[0].mxu0 %v373
  %v642 = vpop.f32.mrb[0].mxu0
  %v643 = vadd.f32 %v104, %v642
  %v644 = vpop.f32.mrb[0].mxu0
  %v645 = vadd.f32 %v108, %v644
  %v646 = vpop.f32.mrb[0].mxu0
  %v647 = vadd.f32 %v104, %v646
  %v648 = vpop.f32.mrb[0].mxu0
  %v649 = vadd.f32 %v108, %v648
  %650 = vmatprep.mubr.bf16.mxu0 0
  %651 = vmatmul.mubr.bf16.gmra.mrb[0].mxu0 %v376
  %v652 = vpop.f32.mrb[0].mxu0
  %v653 = vadd.f32 %v104, %v652
  %v654 = vpop.f32.mrb[0].mxu0
  %v655 = vadd.f32 %v108, %v654
  %v656 = vpop.f32.mrb[0].mxu0
  %v657 = vadd.f32 %v104, %v656
  %v658 = vpop.f32.mrb[0].mxu0
  %v659 = vadd.f32 %v108, %v658
  %660 = vmatprep.mubr.bf16.mxu0 0
  %661 = vmatmul.mubr.bf16.gmra.mrb[0].mxu0 %v379
  %v662 = vpop.f32.mrb[0].mxu0
  %v663 = vadd.f32 %v104, %v662
  %v664 = vpop.f32.mrb[0].mxu0
  %v665 = vadd.f32 %v108, %v664
  %v666 = vpop.f32.mrb[0].mxu0
  %v667 = vadd.f32 %v104, %v666
  %v668 = vpop.f32.mrb[0].mxu0
  %v669 = vadd.f32 %v108, %v668
  %670 = vmatprep.mubr.bf16.mxu0 0
  %671 = vmatmul.mubr.bf16.gmra.mrb[0].mxu0 %v382
  %v672 = vpop.f32.mrb[0].mxu0
  %v673 = vadd.f32 %v104, %v672
  %v674 = vpop.f32.mrb[0].mxu0
  %v675 = vadd.f32 %v108, %v674
  %v676 = vpop.f32.mrb[0].mxu0
  %v677 = vadd.f32 %v104, %v676
  %v678 = vpop.f32.mrb[0].mxu0
  %v679 = vadd.f32 %v108, %v678
  %680 = vmatprep.mubr.bf16.mxu0 0
  %681 = vmatmul.mubr.bf16.gmra.mrb[0].mxu0 %v385
  %v682 = vpop.f32.mrb[0].mxu0
  %v683 = vadd.f32 %v104, %v682
  %v684 = vpop.f32.mrb[0].mxu0
  %v685 = vadd.f32 %v108, %v684
  %v686 = vpop.f32.mrb[0].mxu0
  %v687 = vadd.f32 %v104, %v686
  %v688 = vpop.f32.mrb[0].mxu0
  %v689 = vadd.f32 %v108, %v688
  %690 = vmatprep.mubr.bf16.mxu0 0
  %691 = vmatmul.mubr.bf16.gmra.mrb[0].mxu0 %v388
  %v692 = vpop.f32.mrb[0].mxu0
  %v693 = vadd.f32 %v104, %v692
  %v694 = vpop.f32.mrb[0].mxu0
  %v695 = vadd.f32 %v108, %v694
  %v696 = vpop.f32.mrb[0].mxu0
  %v697 = vadd.f32 %v104, %v696
  %v698 = vpop.f32.mrb[0].mxu0
  %v699 = vadd.f32 %v108, %v698
  %700 = vmatprep.mubr.bf16.mxu0 0
  %701 = vmatmul.mubr.bf16.gmra.mrb[0].mxu0 %v391
  %v702 = vpop.f32.mrb[0].mxu0
  %v703 = vadd.f32 %v104, %v702
  %v704 = vpop.f32.mrb[0].mxu0
  %v705 = vadd.f32 %v108, %v704
  %v706 = vpop.f32.mrb[0].mxu0
  %v707 = vadd.f32 %v104, %v706
  %v708 = vpop.f32.mrb[0].mxu0
  %v709 = vadd.f32 %v108, %v708
  %710 = vmatprep.mubr.bf16.mxu0 0
  %711 = vmatmul.mubr.bf16.gmra.mrb[0].mxu0 %v394
  %v712 = vpop.f32.mrb[0].mxu0
  %v713 = vadd.f32 %v104, %v712
  %v714 = vpop.f32.mrb[0].mxu0
  %v715 = vadd.f32 %v108, %v714
  %v716 = vpop.f32.mrb[0].mxu0
  %v717 = vadd.f32 %v104, %v716
  %v718 = vpop.f32.mrb[0].mxu0
  %v719 = vadd.f32 %v108, %v718
  %720 = vmatprep.mubr.bf16.mxu0 0
  %721 = vmatmul.mubr.bf16.gmra.mrb[0].mxu0 %v397
  %v722 = vpop.f32.mrb[0].mxu0
  %v723 = vadd.f32 %v104, %v722
  %v724 = vpop.f32.mrb[0].mxu0
  %v725 = vadd.f32 %v108, %v724
  %v726 = vpop.f32.mrb[0].mxu0
  %v727 = vadd.f32 %v104, %v726
  %v728 = vpop.f32.mrb[0].mxu0
  %v729 = vadd.f32 %v108, %v728
  %730 = vmatprep.mubr.bf16.mxu0 0
  %731 = vmatmul.mubr.bf16.gmra.mrb[0].mxu0 %v400
  %v732 = vpop.f32.mrb[0].mxu0
  %v733 = vadd.f32 %v104, %v732
  %v734 = vpop.f32.mrb[0].mxu0
  %v735 = vadd.f32 %v108, %v734
  %v736 = vpop.f32.mrb[0].mxu0
  %v737 = vadd.f32 %v104, %v736
  %v738 = vpop.f32.mrb[0].mxu0
  %v739 = vadd.f32 %v108, %v738
  %740 = vmatprep.mubr.bf16.mxu0 0
  %741 = vmatmul.mubr.bf16.gmra.mrb[0].mxu0 %v403
  %v742 = vpop.f32.mrb[0].mxu0
  %v743 = vadd.f32 %v104, %v742
  %v744 = vpop.f32.mrb[0].mxu0
  %v745 = vadd.f32 %v108, %v744
  %v746 = vpop.f32.mrb[0].mxu0
  %v747 = vadd.f32 %v104, %v746
  %v748 = vpop.f32.mrb[0].mxu0
  %v749 = vadd.f32 %v108, %v748
  %750 = vmatprep.mubr.bf16.mxu0 0
  %751 = vmatmul.mubr.bf16.gmra.mrb[0].mxu0 %v406
  %v752 = vpop.f32.mrb[0].mxu0
  %v753 = vadd.f32 %v104, %v752
  %v754 = vpop.f32.mrb[0].mxu0
  %v755 = vadd.f32 %v108, %v754
  %v756 = vpop.f32.mrb[0].mxu0
  %v757 = vadd.f32 %v104, %v756
  %v758 = vpop.f32.mrb[0].mxu0
  %v759 = vadd.f32 %v108, %v758
  %760 = vdwg.mxu0
  %v761 = vmax.f32 %v443, 0.0
  %v762 = vmax.f32 %v445, 0.0
  %v763 = vmax.f32 %v447, 0.0
  %v764 = vmax.f32 %v449, 0.0
  %v765 = vmax.f32 %v453, 0.0
  %v766 = vmax.f32 %v455, 0.0
  %v767 = vmax.f32 %v457, 0.0
  %v768 = vmax.f32 %v459, 0.0
  %v769 = vmax.f32 %v463, 0.0
  %v770 = vmax.f32 %v465, 0.0
  %v771 = vmax.f32 %v467, 0.0
  %v772 = vmax.f32 %v469, 0.0
  %v773 = vmax.f32 %v473, 0.0
  %v774 = vmax.f32 %v475, 0.0
  %v775 = vmax.f32 %v477, 0.0
  %v776 = vmax.f32 %v479, 0.0
  %v777 = vmax.f32 %v483, 0.0
  %v778 = vmax.f32 %v485, 0.0
  %v779 = vmax.f32 %v487, 0.0
  %v780 = vmax.f32 %v489, 0.0
  %v781 = vmax.f32 %v493, 0.0
  %v782 = vmax.f32 %v495, 0.0
  %v783 = vmax.f32 %v497, 0.0
  %v784 = vmax.f32 %v499, 0.0
  %v785 = vmax.f32 %v503, 0.0
  %v786 = vmax.f32 %v505, 0.0
  %v787 = vmax.f32 %v507, 0.0
  %v788 = vmax.f32 %v509, 0.0
  %v789 = vmax.f32 %v513, 0.0
  %v790 = vmax.f32 %v515, 0.0
  %v791 = vmax.f32 %v517, 0.0
  %v792 = vmax.f32 %v519, 0.0
  %v793 = vmax.f32 %v523, 0.0
  %v794 = vmax.f32 %v525, 0.0
  %v795 = vmax.f32 %v527, 0.0
  %v796 = vmax.f32 %v529, 0.0
  %v797 = vmax.f32 %v533, 0.0
  %v798 = vmax.f32 %v535, 0.0
  %v799 = vmax.f32 %v537, 0.0
  %v800 = vmax.f32 %v539, 0.0
  %v801 = vmax.f32 %v543, 0.0
  %v802 = vmax.f32 %v545, 0.0
  %v803 = vmax.f32 %v547, 0.0
  %v804 = vmax.f32 %v549, 0.0
  %v805 = vmax.f32 %v553, 0.0
  %v806 = vmax.f32 %v555, 0.0
  %v807 = vmax.f32 %v557, 0.0
  %v808 = vmax.f32 %v559, 0.0
  %v809 = vmax.f32 %v563, 0.0
  %v810 = vmax.f32 %v565, 0.0
  %v811 = vmax.f32 %v567, 0.0
  %v812 = vmax.f32 %v569, 0.0
  %v813 = vmax.f32 %v573, 0.0
  %v814 = vmax.f32 %v575, 0.0
  %v815 = vmax.f32 %v577, 0.0
  %v816 = vmax.f32 %v579, 0.0
  %v817 = vmax.f32 %v583, 0.0
  %v818 = vmax.f32 %v585, 0.0
  %v819 = vmax.f32 %v587, 0.0
  %v820 = vmax.f32 %v589, 0.0
  %v821 = vmax.f32 %v593, 0.0
  %v822 = vmax.f32 %v595, 0.0
  %v823 = vmax.f32 %v597, 0.0
  %v824 = vmax.f32 %v599, 0.0
  %v825 = vmax.f32 %v603, 0.0
  %v826 = vmax.f32 %v605, 0.0
  %v827 = vmax.f32 %v607, 0.0
  %v828 = vmax.f32 %v609, 0.0
  %v829 = vmax.f32 %v613, 0.0
  %v830 = vmax.f32 %v615, 0.0
  %v831 = vmax.f32 %v617, 0.0
  %v832 = vmax.f32 %v619, 0.0
  %v833 = vmax.f32 %v623, 0.0
  %v834 = vmax.f32 %v625, 0.0
  %v835 = vmax.f32 %v627, 0.0
  %v836 = vmax.f32 %v629, 0.0
  %v837 = vmax.f32 %v633, 0.0
  %v838 = vmax.f32 %v635, 0.0
  %v839 = vmax.f32 %v637, 0.0
  %v840 = vmax.f32 %v639, 0.0
  %v841 = vmax.f32 %v643, 0.0
  %v842 = vmax.f32 %v645, 0.0
  %v843 = vmax.f32 %v647, 0.0
  %v844 = vmax.f32 %v649, 0.0
  %v845 = vmax.f32 %v653, 0.0
  %v846 = vmax.f32 %v655, 0.0
  %v847 = vmax.f32 %v657, 0.0
  %v848 = vmax.f32 %v659, 0.0
  %v849 = vmax.f32 %v663, 0.0
  %v850 = vmax.f32 %v665, 0.0
  %v851 = vmax.f32 %v667, 0.0
  %v852 = vmax.f32 %v669, 0.0
  %v853 = vmax.f32 %v673, 0.0
  %v854 = vmax.f32 %v675, 0.0
  %v855 = vmax.f32 %v677, 0.0
  %v856 = vmax.f32 %v679, 0.0
  %v857 = vmax.f32 %v683, 0.0
  %v858 = vmax.f32 %v685, 0.0
  %v859 = vmax.f32 %v687, 0.0
  %v860 = vmax.f32 %v689, 0.0
  %v861 = vmax.f32 %v693, 0.0
  %v862 = vmax.f32 %v695, 0.0
  %v863 = vmax.f32 %v697, 0.0
  %v864 = vmax.f32 %v699, 0.0
  %v865 = vmax.f32 %v703, 0.0
  %v866 = vmax.f32 %v705, 0.0
  %v867 = vmax.f32 %v707, 0.0
  %v868 = vmax.f32 %v709, 0.0
  %v869 = vmax.f32 %v713, 0.0
  %v870 = vmax.f32 %v715, 0.0
  %v871 = vmax.f32 %v717, 0.0
  %v872 = vmax.f32 %v719, 0.0
  %v873 = vmax.f32 %v723, 0.0
  %v874 = vmax.f32 %v725, 0.0
  %v875 = vmax.f32 %v727, 0.0
  %v876 = vmax.f32 %v729, 0.0
  %v877 = vmax.f32 %v733, 0.0
  %v878 = vmax.f32 %v735, 0.0
  %v879 = vmax.f32 %v737, 0.0
  %v880 = vmax.f32 %v739, 0.0
  %v881 = vmax.f32 %v743, 0.0
  %v882 = vmax.f32 %v745, 0.0
  %v883 = vmax.f32 %v747, 0.0
  %v884 = vmax.f32 %v749, 0.0
  %v885 = vmax.f32 %v753, 0.0
  %v886 = vmax.f32 %v755, 0.0
  %v887 = vmax.f32 %v757, 0.0
  %v888 = vmax.f32 %v759, 0.0
  %v889 = vpack.c.bf16 %v763, %v761
  %v890 = vpack.c.bf16 %v764, %v762
  %v891 = vpack.c.bf16 %v767, %v765
  %v892 = vpack.c.bf16 %v768, %v766
  %v893 = vpack.c.bf16 %v771, %v769
  %v894 = vpack.c.bf16 %v772, %v770
  %v895 = vpack.c.bf16 %v775, %v773
  %v896 = vpack.c.bf16 %v776, %v774
  %v897 = vpack.c.bf16 %v779, %v777
  %v898 = vpack.c.bf16 %v780, %v778
  %v899 = vpack.c.bf16 %v783, %v781
  %v900 = vpack.c.bf16 %v784, %v782
  %v901 = vpack.c.bf16 %v787, %v785
  %v902 = vpack.c.bf16 %v788, %v786
  %v903 = vpack.c.bf16 %v791, %v789
  %v904 = vpack.c.bf16 %v792, %v790
  %v905 = vpack.c.bf16 %v795, %v793
  %v906 = vpack.c.bf16 %v796, %v794
  %v907 = vpack.c.bf16 %v799, %v797
  %v908 = vpack.c.bf16 %v800, %v798
  %v909 = vpack.c.bf16 %v803, %v801
  %v910 = vpack.c.bf16 %v804, %v802
  %v911 = vpack.c.bf16 %v807, %v805
  %v912 = vpack.c.bf16 %v808, %v806
  %v913 = vpack.c.bf16 %v811, %v809
  %v914 = vpack.c.bf16 %v812, %v810
  %v915 = vpack.c.bf16 %v815, %v813
  %v916 = vpack.c.bf16 %v816, %v814
  %v917 = vpack.c.bf16 %v819, %v817
  %v918 = vpack.c.bf16 %v820, %v818
  %v919 = vpack.c.bf16 %v823, %v821
  %v920 = vpack.c.bf16 %v824, %v822
  %v921 = vpack.c.bf16 %v827, %v825
  %v922 = vpack.c.bf16 %v828, %v826
  %v923 = vpack.c.bf16 %v831, %v829
  %v924 = vpack.c.bf16 %v832, %v830
  %v925 = vpack.c.bf16 %v835, %v833
  %v926 = vpack.c.bf16 %v836, %v834
  %v927 = vpack.c.bf16 %v839, %v837
  %v928 = vpack.c.bf16 %v840, %v838
  %v929 = vpack.c.bf16 %v843, %v841
  %v930 = vpack.c.bf16 %v844, %v842
  %v931 = vpack.c.bf16 %v847, %v845
  %v932 = vpack.c.bf16 %v848, %v846
  %v933 = vpack.c.bf16 %v851, %v849
  %v934 = vpack.c.bf16 %v852, %v850
  %v935 = vpack.c.bf16 %v855, %v853
  %v936 = vpack.c.bf16 %v856, %v854
  %v937 = vpack.c.bf16 %v859, %v857
  %v938 = vpack.c.bf16 %v860, %v858
  %v939 = vpack.c.bf16 %v863, %v861
  %v940 = vpack.c.bf16 %v864, %v862
  %v941 = vpack.c.bf16 %v867, %v865
  %v942 = vpack.c.bf16 %v868, %v866
  %v943 = vpack.c.bf16 %v871, %v869
  %v944 = vpack.c.bf16 %v872, %v870
  %v945 = vpack.c.bf16 %v875, %v873
  %v946 = vpack.c.bf16 %v876, %v874
  %v947 = vpack.c.bf16 %v879, %v877
  %v948 = vpack.c.bf16 %v880, %v878
  %v949 = vpack.c.bf16 %v883, %v881
  %v950 = vpack.c.bf16 %v884, %v882
  %v951 = vpack.c.bf16 %v887, %v885
  %v952 = vpack.c.bf16 %v888, %v886
  %v953 = vld [vmem:[%s3] sm:$0xff]
  %v954 = vld [vmem:[%s3 + $0x8] sm:$0xff]
  %v955 = vld [vmem:[%s3 + $0x10] sm:$0xff]
  %v956 = vld [vmem:[%s3 + $0x18] sm:$0xff]
  %v957 = vld [vmem:[%s3 + $0x20] sm:$0xff]
  %v958 = vld [vmem:[%s3 + $0x28] sm:$0xff]
  %v959 = vld [vmem:[%s3 + $0x30] sm:$0xff]
  %v960 = vld [vmem:[%s3 + $0x38] sm:$0xff]
  %v961 = vld [vmem:[%s3 + $0x40] sm:$0xff]
  %v962 = vld [vmem:[%s3 + $0x48] sm:$0xff]
  %v963 = vld [vmem:[%s3 + $0x50] sm:$0xff]
  %v964 = vld [vmem:[%s3 + $0x58] sm:$0xff]
  %v965 = vld [vmem:[%s3 + $0x60] sm:$0xff]
  %v966 = vld [vmem:[%s3 + $0x68] sm:$0xff]
  %v967 = vld [vmem:[%s3 + $0x70] sm:$0xff]
  %v968 = vld [vmem:[%s3 + $0x78] sm:$0xff]
  %v969 = vld [vmem:[%s3 + $0x80] sm:$0xff]
  %v970 = vld [vmem:[%s3 + $0x88] sm:$0xff]
  %v971 = vld [vmem:[%s3 + $0x90] sm:$0xff]
  %v972 = vld [vmem:[%s3 + $0x98] sm:$0xff]
  %v973 = vld [vmem:[%s3 + $0xa0] sm:$0xff]
  %v974 = vld [vmem:[%s3 + $0xa8] sm:$0xff]
  %v975 = vld [vmem:[%s3 + $0xb0] sm:$0xff]
  %v976 = vld [vmem:[%s3 + $0xb8] sm:$0xff]
  %v977 = vld [vmem:[%s3 + $0xc0] sm:$0xff]
  %v978 = vld [vmem:[%s3 + $0xc8] sm:$0xff]
  %v979 = vld [vmem:[%s3 + $0xd0] sm:$0xff]
  %v980 = vld [vmem:[%s3 + $0xd8] sm:$0xff]
  %v981 = vld [vmem:[%s3 + $0xe0] sm:$0xff]
  %v982 = vld [vmem:[%s3 + $0xe8] sm:$0xff]
  %v983 = vld [vmem:[%s3 + $0xf0] sm:$0xff]
  %v984 = vld [vmem:[%s3 + $0xf8] sm:$0xff]
  %v985 = vld [vmem:[%s4] sm:$0x3]
  %v987 = vlaneseq
  %v988 = vshrl.u32 %v987, 7
  %v989 = vsub.s32 0, %v988
  %v990 = vrot.slane %v985, %v989
  %v991 = vlaneseq
  %v992 = vshrl.u32 %v991, 7
  %v993 = vsub.s32 1, %v992
  %v994 = vrot.slane %v985, %v993
  %v1029 = vunpack.c.l.b16 %v953
  %v1030 = vunpack.c.h.b16 %v953
  %v1031 = vunpack.c.l.b16 %v954
  %v1032 = vunpack.c.h.b16 %v954
  %v1033 = vunpack.c.l.b16 %v955
  %v1034 = vunpack.c.h.b16 %v955
  %v1035 = vunpack.c.l.b16 %v956
  %v1036 = vunpack.c.h.b16 %v956
  %v1037 = vunpack.c.l.b16 %v957
  %v1038 = vunpack.c.h.b16 %v957
  %v1039 = vunpack.c.l.b16 %v958
  %v1040 = vunpack.c.h.b16 %v958
  %v1041 = vunpack.c.l.b16 %v959
  %v1042 = vunpack.c.h.b16 %v959
  %v1043 = vunpack.c.l.b16 %v960
  %v1044 = vunpack.c.h.b16 %v960
  %v1045 = vunpack.c.l.b16 %v961
  %v1046 = vunpack.c.h.b16 %v961
  %v1047 = vunpack.c.l.b16 %v962
  %v1048 = vunpack.c.h.b16 %v962
  %v1049 = vunpack.c.l.b16 %v963
  %v1050 = vunpack.c.h.b16 %v963
  %v1051 = vunpack.c.l.b16 %v964
  %v1052 = vunpack.c.h.b16 %v964
  %v1053 = vunpack.c.l.b16 %v965
  %v1054 = vunpack.c.h.b16 %v965
  %v1055 = vunpack.c.l.b16 %v966
  %v1056 = vunpack.c.h.b16 %v966
  %v1057 = vunpack.c.l.b16 %v967
  %v1058 = vunpack.c.h.b16 %v967
  %v1059 = vunpack.c.l.b16 %v968
  %v1060 = vunpack.c.h.b16 %v968
  %v1061 = vunpack.c.l.b16 %v969
  %v1062 = vunpack.c.h.b16 %v969
  %v1063 = vunpack.c.l.b16 %v970
  %v1064 = vunpack.c.h.b16 %v970
  %v1065 = vunpack.c.l.b16 %v971
  %v1066 = vunpack.c.h.b16 %v971
  %v1067 = vunpack.c.l.b16 %v972
  %v1068 = vunpack.c.h.b16 %v972
  %v1069 = vunpack.c.l.b16 %v973
  %v1070 = vunpack.c.h.b16 %v973
  %v1071 = vunpack.c.l.b16 %v974
  %v1072 = vunpack.c.h.b16 %v974
  %v1073 = vunpack.c.l.b16 %v975
  %v1074 = vunpack.c.h.b16 %v975
  %v1075 = vunpack.c.l.b16 %v976
  %v1076 = vunpack.c.h.b16 %v976
  %v1077 = vunpack.c.l.b16 %v977
  %v1078 = vunpack.c.h.b16 %v977
  %v1079 = vunpack.c.l.b16 %v978
  %v1080 = vunpack.c.h.b16 %v978
  %v1081 = vunpack.c.l.b16 %v979
  %v1082 = vunpack.c.h.b16 %v979
  %v1083 = vunpack.c.l.b16 %v980
  %v1084 = vunpack.c.h.b16 %v980
  %v1085 = vunpack.c.l.b16 %v981
  %v1086 = vunpack.c.h.b16 %v981
  %v1087 = vunpack.c.l.b16 %v982
  %v1088 = vunpack.c.h.b16 %v982
  %v1089 = vunpack.c.l.b16 %v983
  %v1090 = vunpack.c.h.b16 %v983
  %v1091 = vunpack.c.l.b16 %v984
  %v1092 = vunpack.c.h.b16 %v984
  %v1093 = vpack.c.b16 %v1031, %v1029
  %v1094 = vpack.c.b16 %v1032, %v1030
  %v1095 = vpack.c.b16 %v1035, %v1033
  %v1096 = vpack.c.b16 %v1036, %v1034
  %v1097 = vpack.c.b16 %v1039, %v1037
  %v1098 = vpack.c.b16 %v1040, %v1038
  %v1099 = vpack.c.b16 %v1043, %v1041
  %v1100 = vpack.c.b16 %v1044, %v1042
  %v1101 = vpack.c.b16 %v1047, %v1045
  %v1102 = vpack.c.b16 %v1048, %v1046
  %v1103 = vpack.c.b16 %v1051, %v1049
  %v1104 = vpack.c.b16 %v1052, %v1050
  %v1105 = vpack.c.b16 %v1055, %v1053
  %v1106 = vpack.c.b16 %v1056, %v1054
  %v1107 = vpack.c.b16 %v1059, %v1057
  %v1108 = vpack.c.b16 %v1060, %v1058
  %v1109 = vpack.c.b16 %v1063, %v1061
  %v1110 = vpack.c.b16 %v1064, %v1062
  %v1111 = vpack.c.b16 %v1067, %v1065
  %v1112 = vpack.c.b16 %v1068, %v1066
  %v1113 = vpack.c.b16 %v1071, %v1069
  %v1114 = vpack.c.b16 %v1072, %v1070
  %v1115 = vpack.c.b16 %v1075, %v1073
  %v1116 = vpack.c.b16 %v1076, %v1074
  %v1117 = vpack.c.b16 %v1079, %v1077
  %v1118 = vpack.c.b16 %v1080, %v1078
  %v1119 = vpack.c.b16 %v1083, %v1081
  %v1120 = vpack.c.b16 %v1084, %v1082
  %v1121 = vpack.c.b16 %v1087, %v1085
  %v1122 = vpack.c.b16 %v1088, %v1086
  %v1123 = vpack.c.b16 %v1091, %v1089
  %v1124 = vpack.c.b16 %v1092, %v1090
  %1157 = vmatprep.subr.bf16.mxu0 %v1094
  %1158 = vmatpush1.bf16.msra.mxu0 %v1093
  %1159 = vmatprep.subr.bf16.mxu0 %v1096
  %1160 = vmatpush1.bf16.msra.mxu0 %v1095
  %1161 = vmatprep.subr.bf16.mxu0 %v1098
  %1162 = vmatpush1.bf16.msra.mxu0 %v1097
  %1163 = vmatprep.subr.bf16.mxu0 %v1100
  %1164 = vmatpush1.bf16.msra.mxu0 %v1099
  %1165 = vmatprep.subr.bf16.mxu0 %v1102
  %1166 = vmatpush1.bf16.msra.mxu0 %v1101
  %1167 = vmatprep.subr.bf16.mxu0 %v1104
  %1168 = vmatpush1.bf16.msra.mxu0 %v1103
  %1169 = vmatprep.subr.bf16.mxu0 %v1106
  %1170 = vmatpush1.bf16.msra.mxu0 %v1105
  %1171 = vmatprep.subr.bf16.mxu0 %v1108
  %1172 = vmatpush1.bf16.msra.mxu0 %v1107
  %1173 = vmatprep.subr.bf16.mxu0 %v1110
  %1174 = vmatpush1.bf16.msra.mxu0 %v1109
  %1175 = vmatprep.subr.bf16.mxu0 %v1112
  %1176 = vmatpush1.bf16.msra.mxu0 %v1111
  %1177 = vmatprep.subr.bf16.mxu0 %v1114
  %1178 = vmatpush1.bf16.msra.mxu0 %v1113
  %1179 = vmatprep.subr.bf16.mxu0 %v1116
  %1180 = vmatpush1.bf16.msra.mxu0 %v1115
  %1181 = vmatprep.subr.bf16.mxu0 %v1118
  %1182 = vmatpush1.bf16.msra.mxu0 %v1117
  %1183 = vmatprep.subr.bf16.mxu0 %v1120
  %1184 = vmatpush1.bf16.msra.mxu0 %v1119
  %1185 = vmatprep.subr.bf16.mxu0 %v1122
  %1186 = vmatpush1.bf16.msra.mxu0 %v1121
  %1187 = vmatprep.subr.bf16.mxu0 %v1124
  %1188 = vmatpush1.bf16.msra.mxu0 %v1123
  %1189 = vmatprep.mubr.bf16.mxu0 %v890
  %1190 = vmatmul.mubr.bf16.gmra.mrb[0].mxu0 %v889
  %v1191 = vpop.f32.mrb[0].mxu0
  %v1192 = vadd.f32 %v990, %v1191
  %v1193 = vpop.f32.mrb[0].mxu0
  %v1194 = vadd.f32 %v994, %v1193
  %v1195 = vpop.f32.mrb[0].mxu0
  %v1196 = vadd.f32 %v990, %v1195
  %v1197 = vpop.f32.mrb[0].mxu0
  %v1198 = vadd.f32 %v994, %v1197
  %1199 = vmatprep.mubr.bf16.mxu0 %v892
  %1200 = vmatmul.mubr.bf16.gmra.mrb[0].mxu0 %v891
  %v1201 = vpop.f32.mrb[0].mxu0
  %v1202 = vadd.f32 %v990, %v1201
  %v1203 = vpop.f32.mrb[0].mxu0
  %v1204 = vadd.f32 %v994, %v1203
  %v1205 = vpop.f32.mrb[0].mxu0
  %v1206 = vadd.f32 %v990, %v1205
  %v1207 = vpop.f32.mrb[0].mxu0
  %v1208 = vadd.f32 %v994, %v1207
  %1209 = vmatprep.mubr.bf16.mxu0 %v894
  %1210 = vmatmul.mubr.bf16.gmra.mrb[0].mxu0 %v893
  %v1211 = vpop.f32.mrb[0].mxu0
  %v1212 = vadd.f32 %v990, %v1211
  %v1213 = vpop.f32.mrb[0].mxu0
  %v1214 = vadd.f32 %v994, %v1213
  %v1215 = vpop.f32.mrb[0].mxu0
  %v1216 = vadd.f32 %v990, %v1215
  %v1217 = vpop.f32.mrb[0].mxu0
  %v1218 = vadd.f32 %v994, %v1217
  %1219 = vmatprep.mubr.bf16.mxu0 %v896
  %1220 = vmatmul.mubr.bf16.gmra.mrb[0].mxu0 %v895
  %v1221 = vpop.f32.mrb[0].mxu0
  %v1222 = vadd.f32 %v990, %v1221
  %v1223 = vpop.f32.mrb[0].mxu0
  %v1224 = vadd.f32 %v994, %v1223
  %v1225 = vpop.f32.mrb[0].mxu0
  %v1226 = vadd.f32 %v990, %v1225
  %v1227 = vpop.f32.mrb[0].mxu0
  %v1228 = vadd.f32 %v994, %v1227
  %1229 = vmatprep.mubr.bf16.mxu0 %v898
  %1230 = vmatmul.mubr.bf16.gmra.mrb[0].mxu0 %v897
  %v1231 = vpop.f32.mrb[0].mxu0
  %v1232 = vadd.f32 %v990, %v1231
  %v1233 = vpop.f32.mrb[0].mxu0
  %v1234 = vadd.f32 %v994, %v1233
  %v1235 = vpop.f32.mrb[0].mxu0
  %v1236 = vadd.f32 %v990, %v1235
  %v1237 = vpop.f32.mrb[0].mxu0
  %v1238 = vadd.f32 %v994, %v1237
  %1239 = vmatprep.mubr.bf16.mxu0 %v900
  %1240 = vmatmul.mubr.bf16.gmra.mrb[0].mxu0 %v899
  %v1241 = vpop.f32.mrb[0].mxu0
  %v1242 = vadd.f32 %v990, %v1241
  %v1243 = vpop.f32.mrb[0].mxu0
  %v1244 = vadd.f32 %v994, %v1243
  %v1245 = vpop.f32.mrb[0].mxu0
  %v1246 = vadd.f32 %v990, %v1245
  %v1247 = vpop.f32.mrb[0].mxu0
  %v1248 = vadd.f32 %v994, %v1247
  %1249 = vmatprep.mubr.bf16.mxu0 %v902
  %1250 = vmatmul.mubr.bf16.gmra.mrb[0].mxu0 %v901
  %v1251 = vpop.f32.mrb[0].mxu0
  %v1252 = vadd.f32 %v990, %v1251
  %v1253 = vpop.f32.mrb[0].mxu0
  %v1254 = vadd.f32 %v994, %v1253
  %v1255 = vpop.f32.mrb[0].mxu0
  %v1256 = vadd.f32 %v990, %v1255
  %v1257 = vpop.f32.mrb[0].mxu0
  %v1258 = vadd.f32 %v994, %v1257
  %1259 = vmatprep.mubr.bf16.mxu0 %v904
  %1260 = vmatmul.mubr.bf16.gmra.mrb[0].mxu0 %v903
  %v1261 = vpop.f32.mrb[0].mxu0
  %v1262 = vadd.f32 %v990, %v1261
  %v1263 = vpop.f32.mrb[0].mxu0
  %v1264 = vadd.f32 %v994, %v1263
  %v1265 = vpop.f32.mrb[0].mxu0
  %v1266 = vadd.f32 %v990, %v1265
  %v1267 = vpop.f32.mrb[0].mxu0
  %v1268 = vadd.f32 %v994, %v1267
  %1269 = vmatprep.mubr.bf16.mxu0 %v906
  %1270 = vmatmul.mubr.bf16.gmra.mrb[0].mxu0 %v905
  %v1271 = vpop.f32.mrb[0].mxu0
  %v1272 = vadd.f32 %v990, %v1271
  %v1273 = vpop.f32.mrb[0].mxu0
  %v1274 = vadd.f32 %v994, %v1273
  %v1275 = vpop.f32.mrb[0].mxu0
  %v1276 = vadd.f32 %v990, %v1275
  %v1277 = vpop.f32.mrb[0].mxu0
  %v1278 = vadd.f32 %v994, %v1277
  %1279 = vmatprep.mubr.bf16.mxu0 %v908
  %1280 = vmatmul.mubr.bf16.gmra.mrb[0].mxu0 %v907
  %v1281 = vpop.f32.mrb[0].mxu0
  %v1282 = vadd.f32 %v990, %v1281
  %v1283 = vpop.f32.mrb[0].mxu0
  %v1284 = vadd.f32 %v994, %v1283
  %v1285 = vpop.f32.mrb[0].mxu0
  %v1286 = vadd.f32 %v990, %v1285
  %v1287 = vpop.f32.mrb[0].mxu0
  %v1288 = vadd.f32 %v994, %v1287
  %1289 = vmatprep.mubr.bf16.mxu0 %v910
  %1290 = vmatmul.mubr.bf16.gmra.mrb[0].mxu0 %v909
  %v1291 = vpop.f32.mrb[0].mxu0
  %v1292 = vadd.f32 %v990, %v1291
  %v1293 = vpop.f32.mrb[0].mxu0
  %v1294 = vadd.f32 %v994, %v1293
  %v1295 = vpop.f32.mrb[0].mxu0
  %v1296 = vadd.f32 %v990, %v1295
  %v1297 = vpop.f32.mrb[0].mxu0
  %v1298 = vadd.f32 %v994, %v1297
  %1299 = vmatprep.mubr.bf16.mxu0 %v912
  %1300 = vmatmul.mubr.bf16.gmra.mrb[0].mxu0 %v911
  %v1301 = vpop.f32.mrb[0].mxu0
  %v1302 = vadd.f32 %v990, %v1301
  %v1303 = vpop.f32.mrb[0].mxu0
  %v1304 = vadd.f32 %v994, %v1303
  %v1305 = vpop.f32.mrb[0].mxu0
  %v1306 = vadd.f32 %v990, %v1305
  %v1307 = vpop.f32.mrb[0].mxu0
  %v1308 = vadd.f32 %v994, %v1307
  %1309 = vmatprep.mubr.bf16.mxu0 %v914
  %1310 = vmatmul.mubr.bf16.gmra.mrb[0].mxu0 %v913
  %v1311 = vpop.f32.mrb[0].mxu0
  %v1312 = vadd.f32 %v990, %v1311
  %v1313 = vpop.f32.mrb[0].mxu0
  %v1314 = vadd.f32 %v994, %v1313
  %v1315 = vpop.f32.mrb[0].mxu0
  %v1316 = vadd.f32 %v990, %v1315
  %v1317 = vpop.f32.mrb[0].mxu0
  %v1318 = vadd.f32 %v994, %v1317
  %1319 = vmatprep.mubr.bf16.mxu0 %v916
  %1320 = vmatmul.mubr.bf16.gmra.mrb[0].mxu0 %v915
  %v1321 = vpop.f32.mrb[0].mxu0
  %v1322 = vadd.f32 %v990, %v1321
  %v1323 = vpop.f32.mrb[0].mxu0
  %v1324 = vadd.f32 %v994, %v1323
  %v1325 = vpop.f32.mrb[0].mxu0
  %v1326 = vadd.f32 %v990, %v1325
  %v1327 = vpop.f32.mrb[0].mxu0
  %v1328 = vadd.f32 %v994, %v1327
  %1329 = vmatprep.mubr.bf16.mxu0 %v918
  %1330 = vmatmul.mubr.bf16.gmra.mrb[0].mxu0 %v917
  %v1331 = vpop.f32.mrb[0].mxu0
  %v1332 = vadd.f32 %v990, %v1331
  %v1333 = vpop.f32.mrb[0].mxu0
  %v1334 = vadd.f32 %v994, %v1333
  %v1335 = vpop.f32.mrb[0].mxu0
  %v1336 = vadd.f32 %v990, %v1335
  %v1337 = vpop.f32.mrb[0].mxu0
  %v1338 = vadd.f32 %v994, %v1337
  %1339 = vmatprep.mubr.bf16.mxu0 %v920
  %1340 = vmatmul.mubr.bf16.gmra.mrb[0].mxu0 %v919
  %v1341 = vpop.f32.mrb[0].mxu0
  %v1342 = vadd.f32 %v990, %v1341
  %v1343 = vpop.f32.mrb[0].mxu0
  %v1344 = vadd.f32 %v994, %v1343
  %v1345 = vpop.f32.mrb[0].mxu0
  %v1346 = vadd.f32 %v990, %v1345
  %v1347 = vpop.f32.mrb[0].mxu0
  %v1348 = vadd.f32 %v994, %v1347
  %1349 = vmatprep.mubr.bf16.mxu0 %v922
  %1350 = vmatmul.mubr.bf16.gmra.mrb[0].mxu0 %v921
  %v1351 = vpop.f32.mrb[0].mxu0
  %v1352 = vadd.f32 %v990, %v1351
  %v1353 = vpop.f32.mrb[0].mxu0
  %v1354 = vadd.f32 %v994, %v1353
  %v1355 = vpop.f32.mrb[0].mxu0
  %v1356 = vadd.f32 %v990, %v1355
  %v1357 = vpop.f32.mrb[0].mxu0
  %v1358 = vadd.f32 %v994, %v1357
  %1359 = vmatprep.mubr.bf16.mxu0 %v924
  %1360 = vmatmul.mubr.bf16.gmra.mrb[0].mxu0 %v923
  %v1361 = vpop.f32.mrb[0].mxu0
  %v1362 = vadd.f32 %v990, %v1361
  %v1363 = vpop.f32.mrb[0].mxu0
  %v1364 = vadd.f32 %v994, %v1363
  %v1365 = vpop.f32.mrb[0].mxu0
  %v1366 = vadd.f32 %v990, %v1365
  %v1367 = vpop.f32.mrb[0].mxu0
  %v1368 = vadd.f32 %v994, %v1367
  %1369 = vmatprep.mubr.bf16.mxu0 %v926
  %1370 = vmatmul.mubr.bf16.gmra.mrb[0].mxu0 %v925
  %v1371 = vpop.f32.mrb[0].mxu0
  %v1372 = vadd.f32 %v990, %v1371
  %v1373 = vpop.f32.mrb[0].mxu0
  %v1374 = vadd.f32 %v994, %v1373
  %v1375 = vpop.f32.mrb[0].mxu0
  %v1376 = vadd.f32 %v990, %v1375
  %v1377 = vpop.f32.mrb[0].mxu0
  %v1378 = vadd.f32 %v994, %v1377
  %1379 = vmatprep.mubr.bf16.mxu0 %v928
  %1380 = vmatmul.mubr.bf16.gmra.mrb[0].mxu0 %v927
  %v1381 = vpop.f32.mrb[0].mxu0
  %v1382 = vadd.f32 %v990, %v1381
  %v1383 = vpop.f32.mrb[0].mxu0
  %v1384 = vadd.f32 %v994, %v1383
  %v1385 = vpop.f32.mrb[0].mxu0
  %v1386 = vadd.f32 %v990, %v1385
  %v1387 = vpop.f32.mrb[0].mxu0
  %v1388 = vadd.f32 %v994, %v1387
  %1389 = vmatprep.mubr.bf16.mxu0 %v930
  %1390 = vmatmul.mubr.bf16.gmra.mrb[0].mxu0 %v929
  %v1391 = vpop.f32.mrb[0].mxu0
  %v1392 = vadd.f32 %v990, %v1391
  %v1393 = vpop.f32.mrb[0].mxu0
  %v1394 = vadd.f32 %v994, %v1393
  %v1395 = vpop.f32.mrb[0].mxu0
  %v1396 = vadd.f32 %v990, %v1395
  %v1397 = vpop.f32.mrb[0].mxu0
  %v1398 = vadd.f32 %v994, %v1397
  %1399 = vmatprep.mubr.bf16.mxu0 %v932
  %1400 = vmatmul.mubr.bf16.gmra.mrb[0].mxu0 %v931
  %v1401 = vpop.f32.mrb[0].mxu0
  %v1402 = vadd.f32 %v990, %v1401
  %v1403 = vpop.f32.mrb[0].mxu0
  %v1404 = vadd.f32 %v994, %v1403
  %v1405 = vpop.f32.mrb[0].mxu0
  %v1406 = vadd.f32 %v990, %v1405
  %v1407 = vpop.f32.mrb[0].mxu0
  %v1408 = vadd.f32 %v994, %v1407
  %1409 = vmatprep.mubr.bf16.mxu0 %v934
  %1410 = vmatmul.mubr.bf16.gmra.mrb[0].mxu0 %v933
  %v1411 = vpop.f32.mrb[0].mxu0
  %v1412 = vadd.f32 %v990, %v1411
  %v1413 = vpop.f32.mrb[0].mxu0
  %v1414 = vadd.f32 %v994, %v1413
  %v1415 = vpop.f32.mrb[0].mxu0
  %v1416 = vadd.f32 %v990, %v1415
  %v1417 = vpop.f32.mrb[0].mxu0
  %v1418 = vadd.f32 %v994, %v1417
  %1419 = vmatprep.mubr.bf16.mxu0 %v936
  %1420 = vmatmul.mubr.bf16.gmra.mrb[0].mxu0 %v935
  %v1421 = vpop.f32.mrb[0].mxu0
  %v1422 = vadd.f32 %v990, %v1421
  %v1423 = vpop.f32.mrb[0].mxu0
  %v1424 = vadd.f32 %v994, %v1423
  %v1425 = vpop.f32.mrb[0].mxu0
  %v1426 = vadd.f32 %v990, %v1425
  %v1427 = vpop.f32.mrb[0].mxu0
  %v1428 = vadd.f32 %v994, %v1427
  %1429 = vmatprep.mubr.bf16.mxu0 %v938
  %1430 = vmatmul.mubr.bf16.gmra.mrb[0].mxu0 %v937
  %v1431 = vpop.f32.mrb[0].mxu0
  %v1432 = vadd.f32 %v990, %v1431
  %v1433 = vpop.f32.mrb[0].mxu0
  %v1434 = vadd.f32 %v994, %v1433
  %v1435 = vpop.f32.mrb[0].mxu0
  %v1436 = vadd.f32 %v990, %v1435
  %v1437 = vpop.f32.mrb[0].mxu0
  %v1438 = vadd.f32 %v994, %v1437
  %1439 = vmatprep.mubr.bf16.mxu0 %v940
  %1440 = vmatmul.mubr.bf16.gmra.mrb[0].mxu0 %v939
  %v1441 = vpop.f32.mrb[0].mxu0
  %v1442 = vadd.f32 %v990, %v1441
  %v1443 = vpop.f32.mrb[0].mxu0
  %v1444 = vadd.f32 %v994, %v1443
  %v1445 = vpop.f32.mrb[0].mxu0
  %v1446 = vadd.f32 %v990, %v1445
  %v1447 = vpop.f32.mrb[0].mxu0
  %v1448 = vadd.f32 %v994, %v1447
  %1449 = vmatprep.mubr.bf16.mxu0 %v942
  %1450 = vmatmul.mubr.bf16.gmra.mrb[0].mxu0 %v941
  %v1451 = vpop.f32.mrb[0].mxu0
  %v1452 = vadd.f32 %v990, %v1451
  %v1453 = vpop.f32.mrb[0].mxu0
  %v1454 = vadd.f32 %v994, %v1453
  %v1455 = vpop.f32.mrb[0].mxu0
  %v1456 = vadd.f32 %v990, %v1455
  %v1457 = vpop.f32.mrb[0].mxu0
  %v1458 = vadd.f32 %v994, %v1457
  %1459 = vmatprep.mubr.bf16.mxu0 %v944
  %1460 = vmatmul.mubr.bf16.gmra.mrb[0].mxu0 %v943
  %v1461 = vpop.f32.mrb[0].mxu0
  %v1462 = vadd.f32 %v990, %v1461
  %v1463 = vpop.f32.mrb[0].mxu0
  %v1464 = vadd.f32 %v994, %v1463
  %v1465 = vpop.f32.mrb[0].mxu0
  %v1466 = vadd.f32 %v990, %v1465
  %v1467 = vpop.f32.mrb[0].mxu0
  %v1468 = vadd.f32 %v994, %v1467
  %1469 = vmatprep.mubr.bf16.mxu0 %v946
  %1470 = vmatmul.mubr.bf16.gmra.mrb[0].mxu0 %v945
  %v1471 = vpop.f32.mrb[0].mxu0
  %v1472 = vadd.f32 %v990, %v1471
  %v1473 = vpop.f32.mrb[0].mxu0
  %v1474 = vadd.f32 %v994, %v1473
  %v1475 = vpop.f32.mrb[0].mxu0
  %v1476 = vadd.f32 %v990, %v1475
  %v1477 = vpop.f32.mrb[0].mxu0
  %v1478 = vadd.f32 %v994, %v1477
  %1479 = vmatprep.mubr.bf16.mxu0 %v948
  %1480 = vmatmul.mubr.bf16.gmra.mrb[0].mxu0 %v947
  %v1481 = vpop.f32.mrb[0].mxu0
  %v1482 = vadd.f32 %v990, %v1481
  %v1483 = vpop.f32.mrb[0].mxu0
  %v1484 = vadd.f32 %v994, %v1483
  %v1485 = vpop.f32.mrb[0].mxu0
  %v1486 = vadd.f32 %v990, %v1485
  %v1487 = vpop.f32.mrb[0].mxu0
  %v1488 = vadd.f32 %v994, %v1487
  %1489 = vmatprep.mubr.bf16.mxu0 %v950
  %1490 = vmatmul.mubr.bf16.gmra.mrb[0].mxu0 %v949
  %v1491 = vpop.f32.mrb[0].mxu0
  %v1492 = vadd.f32 %v990, %v1491
  %v1493 = vpop.f32.mrb[0].mxu0
  %v1494 = vadd.f32 %v994, %v1493
  %v1495 = vpop.f32.mrb[0].mxu0
  %v1496 = vadd.f32 %v990, %v1495
  %v1497 = vpop.f32.mrb[0].mxu0
  %v1498 = vadd.f32 %v994, %v1497
  %1499 = vmatprep.mubr.bf16.mxu0 %v952
  %1500 = vmatmul.mubr.bf16.gmra.mrb[0].mxu0 %v951
  %v1501 = vpop.f32.mrb[0].mxu0
  %v1502 = vadd.f32 %v990, %v1501
  %v1503 = vpop.f32.mrb[0].mxu0
  %v1504 = vadd.f32 %v994, %v1503
  %v1505 = vpop.f32.mrb[0].mxu0
  %v1506 = vadd.f32 %v990, %v1505
  %v1507 = vpop.f32.mrb[0].mxu0
  %v1508 = vadd.f32 %v994, %v1507
  %1509 = vdwg.mxu0
  %v1510 = vmax.f32 %v1192, 0.0
  %v1511 = vmax.f32 %v1194, 0.0
  %v1512 = vmax.f32 %v1196, 0.0
  %v1513 = vmax.f32 %v1198, 0.0
  %v1514 = vmax.f32 %v1202, 0.0
  %v1515 = vmax.f32 %v1204, 0.0
  %v1516 = vmax.f32 %v1206, 0.0
  %v1517 = vmax.f32 %v1208, 0.0
  %v1518 = vmax.f32 %v1212, 0.0
  %v1519 = vmax.f32 %v1214, 0.0
  %v1520 = vmax.f32 %v1216, 0.0
  %v1521 = vmax.f32 %v1218, 0.0
  %v1522 = vmax.f32 %v1222, 0.0
  %v1523 = vmax.f32 %v1224, 0.0
  %v1524 = vmax.f32 %v1226, 0.0
  %v1525 = vmax.f32 %v1228, 0.0
  %v1526 = vmax.f32 %v1232, 0.0
  %v1527 = vmax.f32 %v1234, 0.0
  %v1528 = vmax.f32 %v1236, 0.0
  %v1529 = vmax.f32 %v1238, 0.0
  %v1530 = vmax.f32 %v1242, 0.0
  %v1531 = vmax.f32 %v1244, 0.0
  %v1532 = vmax.f32 %v1246, 0.0
  %v1533 = vmax.f32 %v1248, 0.0
  %v1534 = vmax.f32 %v1252, 0.0
  %v1535 = vmax.f32 %v1254, 0.0
  %v1536 = vmax.f32 %v1256, 0.0
  %v1537 = vmax.f32 %v1258, 0.0
  %v1538 = vmax.f32 %v1262, 0.0
  %v1539 = vmax.f32 %v1264, 0.0
  %v1540 = vmax.f32 %v1266, 0.0
  %v1541 = vmax.f32 %v1268, 0.0
  %v1542 = vmax.f32 %v1272, 0.0
  %v1543 = vmax.f32 %v1274, 0.0
  %v1544 = vmax.f32 %v1276, 0.0
  %v1545 = vmax.f32 %v1278, 0.0
  %v1546 = vmax.f32 %v1282, 0.0
  %v1547 = vmax.f32 %v1284, 0.0
  %v1548 = vmax.f32 %v1286, 0.0
  %v1549 = vmax.f32 %v1288, 0.0
  %v1550 = vmax.f32 %v1292, 0.0
  %v1551 = vmax.f32 %v1294, 0.0
  %v1552 = vmax.f32 %v1296, 0.0
  %v1553 = vmax.f32 %v1298, 0.0
  %v1554 = vmax.f32 %v1302, 0.0
  %v1555 = vmax.f32 %v1304, 0.0
  %v1556 = vmax.f32 %v1306, 0.0
  %v1557 = vmax.f32 %v1308, 0.0
  %v1558 = vmax.f32 %v1312, 0.0
  %v1559 = vmax.f32 %v1314, 0.0
  %v1560 = vmax.f32 %v1316, 0.0
  %v1561 = vmax.f32 %v1318, 0.0
  %v1562 = vmax.f32 %v1322, 0.0
  %v1563 = vmax.f32 %v1324, 0.0
  %v1564 = vmax.f32 %v1326, 0.0
  %v1565 = vmax.f32 %v1328, 0.0
  %v1566 = vmax.f32 %v1332, 0.0
  %v1567 = vmax.f32 %v1334, 0.0
  %v1568 = vmax.f32 %v1336, 0.0
  %v1569 = vmax.f32 %v1338, 0.0
  %v1570 = vmax.f32 %v1342, 0.0
  %v1571 = vmax.f32 %v1344, 0.0
  %v1572 = vmax.f32 %v1346, 0.0
  %v1573 = vmax.f32 %v1348, 0.0
  %v1574 = vmax.f32 %v1352, 0.0
  %v1575 = vmax.f32 %v1354, 0.0
  %v1576 = vmax.f32 %v1356, 0.0
  %v1577 = vmax.f32 %v1358, 0.0
  %v1578 = vmax.f32 %v1362, 0.0
  %v1579 = vmax.f32 %v1364, 0.0
  %v1580 = vmax.f32 %v1366, 0.0
  %v1581 = vmax.f32 %v1368, 0.0
  %v1582 = vmax.f32 %v1372, 0.0
  %v1583 = vmax.f32 %v1374, 0.0
  %v1584 = vmax.f32 %v1376, 0.0
  %v1585 = vmax.f32 %v1378, 0.0
  %v1586 = vmax.f32 %v1382, 0.0
  %v1587 = vmax.f32 %v1384, 0.0
  %v1588 = vmax.f32 %v1386, 0.0
  %v1589 = vmax.f32 %v1388, 0.0
  %v1590 = vmax.f32 %v1392, 0.0
  %v1591 = vmax.f32 %v1394, 0.0
  %v1592 = vmax.f32 %v1396, 0.0
  %v1593 = vmax.f32 %v1398, 0.0
  %v1594 = vmax.f32 %v1402, 0.0
  %v1595 = vmax.f32 %v1404, 0.0
  %v1596 = vmax.f32 %v1406, 0.0
  %v1597 = vmax.f32 %v1408, 0.0
  %v1598 = vmax.f32 %v1412, 0.0
  %v1599 = vmax.f32 %v1414, 0.0
  %v1600 = vmax.f32 %v1416, 0.0
  %v1601 = vmax.f32 %v1418, 0.0
  %v1602 = vmax.f32 %v1422, 0.0
  %v1603 = vmax.f32 %v1424, 0.0
  %v1604 = vmax.f32 %v1426, 0.0
  %v1605 = vmax.f32 %v1428, 0.0
  %v1606 = vmax.f32 %v1432, 0.0
  %v1607 = vmax.f32 %v1434, 0.0
  %v1608 = vmax.f32 %v1436, 0.0
  %v1609 = vmax.f32 %v1438, 0.0
  %v1610 = vmax.f32 %v1442, 0.0
  %v1611 = vmax.f32 %v1444, 0.0
  %v1612 = vmax.f32 %v1446, 0.0
  %v1613 = vmax.f32 %v1448, 0.0
  %v1614 = vmax.f32 %v1452, 0.0
  %v1615 = vmax.f32 %v1454, 0.0
  %v1616 = vmax.f32 %v1456, 0.0
  %v1617 = vmax.f32 %v1458, 0.0
  %v1618 = vmax.f32 %v1462, 0.0
  %v1619 = vmax.f32 %v1464, 0.0
  %v1620 = vmax.f32 %v1466, 0.0
  %v1621 = vmax.f32 %v1468, 0.0
  %v1622 = vmax.f32 %v1472, 0.0
  %v1623 = vmax.f32 %v1474, 0.0
  %v1624 = vmax.f32 %v1476, 0.0
  %v1625 = vmax.f32 %v1478, 0.0
  %v1626 = vmax.f32 %v1482, 0.0
  %v1627 = vmax.f32 %v1484, 0.0
  %v1628 = vmax.f32 %v1486, 0.0
  %v1629 = vmax.f32 %v1488, 0.0
  %v1630 = vmax.f32 %v1492, 0.0
  %v1631 = vmax.f32 %v1494, 0.0
  %v1632 = vmax.f32 %v1496, 0.0
  %v1633 = vmax.f32 %v1498, 0.0
  %v1634 = vmax.f32 %v1502, 0.0
  %v1635 = vmax.f32 %v1504, 0.0
  %v1636 = vmax.f32 %v1506, 0.0
  %v1637 = vmax.f32 %v1508, 0.0
  %v1638 = vld [vmem:[%s5] sm:$0xff]
  %v1639 = vld [vmem:[%s5 + $0x8] sm:$0xff]
  %v1640 = vld [vmem:[%s5 + $0x10] sm:$0xff]
  %v1641 = vld [vmem:[%s5 + $0x18] sm:$0xff]
  %v1642 = vld [vmem:[%s5 + $0x20] sm:$0xff]
  %v1643 = vld [vmem:[%s5 + $0x28] sm:$0xff]
  %v1644 = vld [vmem:[%s5 + $0x30] sm:$0xff]
  %v1645 = vld [vmem:[%s5 + $0x38] sm:$0xff]
  %v1646 = vld [vmem:[%s5 + $0x40] sm:$0xff]
  %v1647 = vld [vmem:[%s5 + $0x48] sm:$0xff]
  %v1648 = vld [vmem:[%s5 + $0x50] sm:$0xff]
  %v1649 = vld [vmem:[%s5 + $0x58] sm:$0xff]
  %v1650 = vld [vmem:[%s5 + $0x60] sm:$0xff]
  %v1651 = vld [vmem:[%s5 + $0x68] sm:$0xff]
  %v1652 = vld [vmem:[%s5 + $0x70] sm:$0xff]
  %v1653 = vld [vmem:[%s5 + $0x78] sm:$0xff]
  %v1654 = vmul.f32 %v1510, %v1638
  %v1655 = vmul.f32 %v1511, %v1639
  %v1656 = vmul.f32 %v1512, %v1640
  %v1657 = vmul.f32 %v1513, %v1641
  %v1658 = vmul.f32 %v1514, %v1642
  %v1659 = vmul.f32 %v1515, %v1643
  %v1660 = vmul.f32 %v1516, %v1644
  %v1661 = vmul.f32 %v1517, %v1645
  %v1662 = vmul.f32 %v1518, %v1646
  %v1663 = vmul.f32 %v1519, %v1647
  %v1664 = vmul.f32 %v1520, %v1648
  %v1665 = vmul.f32 %v1521, %v1649
  %v1666 = vmul.f32 %v1522, %v1650
  %v1667 = vmul.f32 %v1523, %v1651
  %v1668 = vmul.f32 %v1524, %v1652
  %v1669 = vmul.f32 %v1525, %v1653
  %v1670 = vmul.f32 %v1526, %v1638
  %v1671 = vmul.f32 %v1527, %v1639
  %v1672 = vmul.f32 %v1528, %v1640
  %v1673 = vmul.f32 %v1529, %v1641
  %v1674 = vmul.f32 %v1530, %v1642
  %v1675 = vmul.f32 %v1531, %v1643
  %v1676 = vmul.f32 %v1532, %v1644
  %v1677 = vmul.f32 %v1533, %v1645
  %v1678 = vmul.f32 %v1534, %v1646
  %v1679 = vmul.f32 %v1535, %v1647
  %v1680 = vmul.f32 %v1536, %v1648
  %v1681 = vmul.f32 %v1537, %v1649
  %v1682 = vmul.f32 %v1538, %v1650
  %v1683 = vmul.f32 %v1539, %v1651
  %v1684 = vmul.f32 %v1540, %v1652
  %v1685 = vmul.f32 %v1541, %v1653
  %v1686 = vmul.f32 %v1542, %v1638
  %v1687 = vmul.f32 %v1543, %v1639
  %v1688 = vmul.f32 %v1544, %v1640
  %v1689 = vmul.f32 %v1545, %v1641
  %v1690 = vmul.f32 %v1546, %v1642
  %v1691 = vmul.f32 %v1547, %v1643
  %v1692 = vmul.f32 %v1548, %v1644
  %v1693 = vmul.f32 %v1549, %v1645
  %v1694 = vmul.f32 %v1550, %v1646
  %v1695 = vmul.f32 %v1551, %v1647
  %v1696 = vmul.f32 %v1552, %v1648
  %v1697 = vmul.f32 %v1553, %v1649
  %v1698 = vmul.f32 %v1554, %v1650
  %v1699 = vmul.f32 %v1555, %v1651
  %v1700 = vmul.f32 %v1556, %v1652
  %v1701 = vmul.f32 %v1557, %v1653
  %v1702 = vmul.f32 %v1558, %v1638
  %v1703 = vmul.f32 %v1559, %v1639
  %v1704 = vmul.f32 %v1560, %v1640
  %v1705 = vmul.f32 %v1561, %v1641
  %v1706 = vmul.f32 %v1562, %v1642
  %v1707 = vmul.f32 %v1563, %v1643
  %v1708 = vmul.f32 %v1564, %v1644
  %v1709 = vmul.f32 %v1565, %v1645
  %v1710 = vmul.f32 %v1566, %v1646
  %v1711 = vmul.f32 %v1567, %v1647
  %v1712 = vmul.f32 %v1568, %v1648
  %v1713 = vmul.f32 %v1569, %v1649
  %v1714 = vmul.f32 %v1570, %v1650
  %v1715 = vmul.f32 %v1571, %v1651
  %v1716 = vmul.f32 %v1572, %v1652
  %v1717 = vmul.f32 %v1573, %v1653
  %v1718 = vmul.f32 %v1574, %v1638
  %v1719 = vmul.f32 %v1575, %v1639
  %v1720 = vmul.f32 %v1576, %v1640
  %v1721 = vmul.f32 %v1577, %v1641
  %v1722 = vmul.f32 %v1578, %v1642
  %v1723 = vmul.f32 %v1579, %v1643
  %v1724 = vmul.f32 %v1580, %v1644
  %v1725 = vmul.f32 %v1581, %v1645
  %v1726 = vmul.f32 %v1582, %v1646
  %v1727 = vmul.f32 %v1583, %v1647
  %v1728 = vmul.f32 %v1584, %v1648
  %v1729 = vmul.f32 %v1585, %v1649
  %v1730 = vmul.f32 %v1586, %v1650
  %v1731 = vmul.f32 %v1587, %v1651
  %v1732 = vmul.f32 %v1588, %v1652
  %v1733 = vmul.f32 %v1589, %v1653
  %v1734 = vmul.f32 %v1590, %v1638
  %v1735 = vmul.f32 %v1591, %v1639
  %v1736 = vmul.f32 %v1592, %v1640
  %v1737 = vmul.f32 %v1593, %v1641
  %v1738 = vmul.f32 %v1594, %v1642
  %v1739 = vmul.f32 %v1595, %v1643
  %v1740 = vmul.f32 %v1596, %v1644
  %v1741 = vmul.f32 %v1597, %v1645
  %v1742 = vmul.f32 %v1598, %v1646
  %v1743 = vmul.f32 %v1599, %v1647
  %v1744 = vmul.f32 %v1600, %v1648
  %v1745 = vmul.f32 %v1601, %v1649
  %v1746 = vmul.f32 %v1602, %v1650
  %v1747 = vmul.f32 %v1603, %v1651
  %v1748 = vmul.f32 %v1604, %v1652
  %v1749 = vmul.f32 %v1605, %v1653
  %v1750 = vmul.f32 %v1606, %v1638
  %v1751 = vmul.f32 %v1607, %v1639
  %v1752 = vmul.f32 %v1608, %v1640
  %v1753 = vmul.f32 %v1609, %v1641
  %v1754 = vmul.f32 %v1610, %v1642
  %v1755 = vmul.f32 %v1611, %v1643
  %v1756 = vmul.f32 %v1612, %v1644
  %v1757 = vmul.f32 %v1613, %v1645
  %v1758 = vmul.f32 %v1614, %v1646
  %v1759 = vmul.f32 %v1615, %v1647
  %v1760 = vmul.f32 %v1616, %v1648
  %v1761 = vmul.f32 %v1617, %v1649
  %v1762 = vmul.f32 %v1618, %v1650
  %v1763 = vmul.f32 %v1619, %v1651
  %v1764 = vmul.f32 %v1620, %v1652
  %v1765 = vmul.f32 %v1621, %v1653
  %v1766 = vmul.f32 %v1622, %v1638
  %v1767 = vmul.f32 %v1623, %v1639
  %v1768 = vmul.f32 %v1624, %v1640
  %v1769 = vmul.f32 %v1625, %v1641
  %v1770 = vmul.f32 %v1626, %v1642
  %v1771 = vmul.f32 %v1627, %v1643
  %v1772 = vmul.f32 %v1628, %v1644
  %v1773 = vmul.f32 %v1629, %v1645
  %v1774 = vmul.f32 %v1630, %v1646
  %v1775 = vmul.f32 %v1631, %v1647
  %v1776 = vmul.f32 %v1632, %v1648
  %v1777 = vmul.f32 %v1633, %v1649
  %v1778 = vmul.f32 %v1634, %v1650
  %v1779 = vmul.f32 %v1635, %v1651
  %v1780 = vmul.f32 %v1636, %v1652
  %v1781 = vmul.f32 %v1637, %v1653
  %v1782 = vadd.f32 %v1654, %v1656
  %v1783 = vadd.f32 %v1782, %v1658
  %v1784 = vadd.f32 %v1783, %v1660
  %v1785 = vadd.f32 %v1784, %v1662
  %v1786 = vadd.f32 %v1785, %v1664
  %v1787 = vadd.f32 %v1786, %v1666
  %v1788 = vadd.f32 %v1787, %v1668
  %v1789 = vrot.slane %v1788, 4
  %v1790 = vadd.f32 %v1788, %v1789
  %v1791 = vrot.slane %v1790, 2
  %v1792 = vadd.f32 %v1790, %v1791
  %v1793 = vrot.slane %v1792, 1
  %v1794 = vadd.f32 %v1792, %v1793
  %v1795 = vadd.f32 %v1655, %v1657
  %v1796 = vadd.f32 %v1795, %v1659
  %v1797 = vadd.f32 %v1796, %v1661
  %v1798 = vadd.f32 %v1797, %v1663
  %v1799 = vadd.f32 %v1798, %v1665
  %v1800 = vadd.f32 %v1799, %v1667
  %v1801 = vadd.f32 %v1800, %v1669
  %v1802 = vrot.slane %v1801, 4
  %v1803 = vadd.f32 %v1801, %v1802
  %v1804 = vrot.slane %v1803, 2
  %v1805 = vadd.f32 %v1803, %v1804
  %v1806 = vrot.slane %v1805, 1
  %v1807 = vadd.f32 %v1805, %v1806
  %v1808 = vadd.f32 %v1670, %v1672
  %v1809 = vadd.f32 %v1808, %v1674
  %v1810 = vadd.f32 %v1809, %v1676
  %v1811 = vadd.f32 %v1810, %v1678
  %v1812 = vadd.f32 %v1811, %v1680
  %v1813 = vadd.f32 %v1812, %v1682
  %v1814 = vadd.f32 %v1813, %v1684
  %v1815 = vrot.slane %v1814, 4
  %v1816 = vadd.f32 %v1814, %v1815
  %v1817 = vrot.slane %v1816, 2
  %v1818 = vadd.f32 %v1816, %v1817
  %v1819 = vrot.slane %v1818, 1
  %v1820 = vadd.f32 %v1818, %v1819
  %v1821 = vadd.f32 %v1671, %v1673
  %v1822 = vadd.f32 %v1821, %v1675
  %v1823 = vadd.f32 %v1822, %v1677
  %v1824 = vadd.f32 %v1823, %v1679
  %v1825 = vadd.f32 %v1824, %v1681
  %v1826 = vadd.f32 %v1825, %v1683
  %v1827 = vadd.f32 %v1826, %v1685
  %v1828 = vrot.slane %v1827, 4
  %v1829 = vadd.f32 %v1827, %v1828
  %v1830 = vrot.slane %v1829, 2
  %v1831 = vadd.f32 %v1829, %v1830
  %v1832 = vrot.slane %v1831, 1
  %v1833 = vadd.f32 %v1831, %v1832
  %v1834 = vadd.f32 %v1686, %v1688
  %v1835 = vadd.f32 %v1834, %v1690
  %v1836 = vadd.f32 %v1835, %v1692
  %v1837 = vadd.f32 %v1836, %v1694
  %v1838 = vadd.f32 %v1837, %v1696
  %v1839 = vadd.f32 %v1838, %v1698
  %v1840 = vadd.f32 %v1839, %v1700
  %v1841 = vrot.slane %v1840, 4
  %v1842 = vadd.f32 %v1840, %v1841
  %v1843 = vrot.slane %v1842, 2
  %v1844 = vadd.f32 %v1842, %v1843
  %v1845 = vrot.slane %v1844, 1
  %v1846 = vadd.f32 %v1844, %v1845
  %v1847 = vadd.f32 %v1687, %v1689
  %v1848 = vadd.f32 %v1847, %v1691
  %v1849 = vadd.f32 %v1848, %v1693
  %v1850 = vadd.f32 %v1849, %v1695
  %v1851 = vadd.f32 %v1850, %v1697
  %v1852 = vadd.f32 %v1851, %v1699
  %v1853 = vadd.f32 %v1852, %v1701
  %v1854 = vrot.slane %v1853, 4
  %v1855 = vadd.f32 %v1853, %v1854
  %v1856 = vrot.slane %v1855, 2
  %v1857 = vadd.f32 %v1855, %v1856
  %v1858 = vrot.slane %v1857, 1
  %v1859 = vadd.f32 %v1857, %v1858
  %v1860 = vadd.f32 %v1702, %v1704
  %v1861 = vadd.f32 %v1860, %v1706
  %v1862 = vadd.f32 %v1861, %v1708
  %v1863 = vadd.f32 %v1862, %v1710
  %v1864 = vadd.f32 %v1863, %v1712
  %v1865 = vadd.f32 %v1864, %v1714
  %v1866 = vadd.f32 %v1865, %v1716
  %v1867 = vrot.slane %v1866, 4
  %v1868 = vadd.f32 %v1866, %v1867
  %v1869 = vrot.slane %v1868, 2
  %v1870 = vadd.f32 %v1868, %v1869
  %v1871 = vrot.slane %v1870, 1
  %v1872 = vadd.f32 %v1870, %v1871
  %v1873 = vadd.f32 %v1703, %v1705
  %v1874 = vadd.f32 %v1873, %v1707
  %v1875 = vadd.f32 %v1874, %v1709
  %v1876 = vadd.f32 %v1875, %v1711
  %v1877 = vadd.f32 %v1876, %v1713
  %v1878 = vadd.f32 %v1877, %v1715
  %v1879 = vadd.f32 %v1878, %v1717
  %v1880 = vrot.slane %v1879, 4
  %v1881 = vadd.f32 %v1879, %v1880
  %v1882 = vrot.slane %v1881, 2
  %v1883 = vadd.f32 %v1881, %v1882
  %v1884 = vrot.slane %v1883, 1
  %v1885 = vadd.f32 %v1883, %v1884
  %v1886 = vadd.f32 %v1718, %v1720
  %v1887 = vadd.f32 %v1886, %v1722
  %v1888 = vadd.f32 %v1887, %v1724
  %v1889 = vadd.f32 %v1888, %v1726
  %v1890 = vadd.f32 %v1889, %v1728
  %v1891 = vadd.f32 %v1890, %v1730
  %v1892 = vadd.f32 %v1891, %v1732
  %v1893 = vrot.slane %v1892, 4
  %v1894 = vadd.f32 %v1892, %v1893
  %v1895 = vrot.slane %v1894, 2
  %v1896 = vadd.f32 %v1894, %v1895
  %v1897 = vrot.slane %v1896, 1
  %v1898 = vadd.f32 %v1896, %v1897
  %v1899 = vadd.f32 %v1719, %v1721
  %v1900 = vadd.f32 %v1899, %v1723
  %v1901 = vadd.f32 %v1900, %v1725
  %v1902 = vadd.f32 %v1901, %v1727
  %v1903 = vadd.f32 %v1902, %v1729
  %v1904 = vadd.f32 %v1903, %v1731
  %v1905 = vadd.f32 %v1904, %v1733
  %v1906 = vrot.slane %v1905, 4
  %v1907 = vadd.f32 %v1905, %v1906
  %v1908 = vrot.slane %v1907, 2
  %v1909 = vadd.f32 %v1907, %v1908
  %v1910 = vrot.slane %v1909, 1
  %v1911 = vadd.f32 %v1909, %v1910
  %v1912 = vadd.f32 %v1734, %v1736
  %v1913 = vadd.f32 %v1912, %v1738
  %v1914 = vadd.f32 %v1913, %v1740
  %v1915 = vadd.f32 %v1914, %v1742
  %v1916 = vadd.f32 %v1915, %v1744
  %v1917 = vadd.f32 %v1916, %v1746
  %v1918 = vadd.f32 %v1917, %v1748
  %v1919 = vrot.slane %v1918, 4
  %v1920 = vadd.f32 %v1918, %v1919
  %v1921 = vrot.slane %v1920, 2
  %v1922 = vadd.f32 %v1920, %v1921
  %v1923 = vrot.slane %v1922, 1
  %v1924 = vadd.f32 %v1922, %v1923
  %v1925 = vadd.f32 %v1735, %v1737
  %v1926 = vadd.f32 %v1925, %v1739
  %v1927 = vadd.f32 %v1926, %v1741
  %v1928 = vadd.f32 %v1927, %v1743
  %v1929 = vadd.f32 %v1928, %v1745
  %v1930 = vadd.f32 %v1929, %v1747
  %v1931 = vadd.f32 %v1930, %v1749
  %v1932 = vrot.slane %v1931, 4
  %v1933 = vadd.f32 %v1931, %v1932
  %v1934 = vrot.slane %v1933, 2
  %v1935 = vadd.f32 %v1933, %v1934
  %v1936 = vrot.slane %v1935, 1
  %v1937 = vadd.f32 %v1935, %v1936
  %v1938 = vadd.f32 %v1750, %v1752
  %v1939 = vadd.f32 %v1938, %v1754
  %v1940 = vadd.f32 %v1939, %v1756
  %v1941 = vadd.f32 %v1940, %v1758
  %v1942 = vadd.f32 %v1941, %v1760
  %v1943 = vadd.f32 %v1942, %v1762
  %v1944 = vadd.f32 %v1943, %v1764
  %v1945 = vrot.slane %v1944, 4
  %v1946 = vadd.f32 %v1944, %v1945
  %v1947 = vrot.slane %v1946, 2
  %v1948 = vadd.f32 %v1946, %v1947
  %v1949 = vrot.slane %v1948, 1
  %v1950 = vadd.f32 %v1948, %v1949
  %v1951 = vadd.f32 %v1751, %v1753
  %v1952 = vadd.f32 %v1951, %v1755
  %v1953 = vadd.f32 %v1952, %v1757
  %v1954 = vadd.f32 %v1953, %v1759
  %v1955 = vadd.f32 %v1954, %v1761
  %v1956 = vadd.f32 %v1955, %v1763
  %v1957 = vadd.f32 %v1956, %v1765
  %v1958 = vrot.slane %v1957, 4
  %v1959 = vadd.f32 %v1957, %v1958
  %v1960 = vrot.slane %v1959, 2
  %v1961 = vadd.f32 %v1959, %v1960
  %v1962 = vrot.slane %v1961, 1
  %v1963 = vadd.f32 %v1961, %v1962
  %v1964 = vadd.f32 %v1766, %v1768
  %v1965 = vadd.f32 %v1964, %v1770
  %v1966 = vadd.f32 %v1965, %v1772
  %v1967 = vadd.f32 %v1966, %v1774
  %v1968 = vadd.f32 %v1967, %v1776
  %v1969 = vadd.f32 %v1968, %v1778
  %v1970 = vadd.f32 %v1969, %v1780
  %v1971 = vrot.slane %v1970, 4
  %v1972 = vadd.f32 %v1970, %v1971
  %v1973 = vrot.slane %v1972, 2
  %v1974 = vadd.f32 %v1972, %v1973
  %v1975 = vrot.slane %v1974, 1
  %v1976 = vadd.f32 %v1974, %v1975
  %v1977 = vadd.f32 %v1767, %v1769
  %v1978 = vadd.f32 %v1977, %v1771
  %v1979 = vadd.f32 %v1978, %v1773
  %v1980 = vadd.f32 %v1979, %v1775
  %v1981 = vadd.f32 %v1980, %v1777
  %v1982 = vadd.f32 %v1981, %v1779
  %v1983 = vadd.f32 %v1982, %v1781
  %v1984 = vrot.slane %v1983, 4
  %v1985 = vadd.f32 %v1983, %v1984
  %v1986 = vrot.slane %v1985, 2
  %v1987 = vadd.f32 %v1985, %v1986
  %v1988 = vrot.slane %v1987, 1
  %v1989 = vadd.f32 %v1987, %v1988
  %vm2006 = vcmask 1041409
  %v2007 = vsel %vm2006, %v1820, %v1794
  %vm2008 = vcmask 1042434
  %v2009 = vsel %vm2008, %v1846, %v2007
  %vm2010 = vcmask 1043459
  %v2011 = vsel %vm2010, %v1872, %v2009
  %vm2012 = vcmask 1044484
  %v2013 = vsel %vm2012, %v1898, %v2011
  %vm2014 = vcmask 1045509
  %v2015 = vsel %vm2014, %v1924, %v2013
  %vm2016 = vcmask 1046534
  %v2017 = vsel %vm2016, %v1950, %v2015
  %vm2018 = vcmask 1047559
  %v2019 = vsel %vm2018, %v1976, %v2017
  %v2020 = vsel %vm2006, %v1833, %v1807
  %v2021 = vsel %vm2008, %v1859, %v2020
  %v2022 = vsel %vm2010, %v1885, %v2021
  %v2023 = vsel %vm2012, %v1911, %v2022
  %v2024 = vsel %vm2014, %v1937, %v2023
  %v2025 = vsel %vm2016, %v1963, %v2024
  %v2026 = vsel %vm2018, %v1989, %v2025
  %v2029 = vadd.f32 %v2019, %v2026
  %2030 = vadd.xlane.f32.xlu0 %v2029
  %v2031 = vpop.xlane.xlu0 %2030
  %v2032 = vld [vmem:[%s6] sm:$0x1]
  %v2034 = vlaneseq
  %v2035 = vshrl.u32 %v2034, 7
  %v2036 = vsub.s32 0, %v2035
  %v2037 = vrot.slane %v2032, %v2036
  %v2039 = vadd.f32 %v2031, %v2037
  %vm2040 = vcmask 7168
  %2041 = vst.msk [vmem:[%s7] sm:$0xff] %vm2040, %v2039
  %s2042 = scalar_lea.vmem %s5, 128
  %v2043 = vld [vmem:[%s2042] sm:$0xff]
  %v2044 = vld [vmem:[%s2042 + $0x8] sm:$0xff]
  %v2045 = vld [vmem:[%s2042 + $0x10] sm:$0xff]
  %v2046 = vld [vmem:[%s2042 + $0x18] sm:$0xff]
  %v2047 = vld [vmem:[%s2042 + $0x20] sm:$0xff]
  %v2048 = vld [vmem:[%s2042 + $0x28] sm:$0xff]
  %v2049 = vld [vmem:[%s2042 + $0x30] sm:$0xff]
  %v2050 = vld [vmem:[%s2042 + $0x38] sm:$0xff]
  %v2051 = vld [vmem:[%s2042 + $0x40] sm:$0xff]
  %v2052 = vld [vmem:[%s2042 + $0x48] sm:$0xff]
  %v2053 = vld [vmem:[%s2042 + $0x50] sm:$0xff]
  %v2054 = vld [vmem:[%s2042 + $0x58] sm:$0xff]
  %v2055 = vld [vmem:[%s2042 + $0x60] sm:$0xff]
  %v2056 = vld [vmem:[%s2042 + $0x68] sm:$0xff]
  %v2057 = vld [vmem:[%s2042 + $0x70] sm:$0xff]
  %v2058 = vld [vmem:[%s2042 + $0x78] sm:$0xff]
  %v2059 = vmul.f32 %v1510, %v2043
  %v2060 = vmul.f32 %v1511, %v2044
  %v2061 = vmul.f32 %v1512, %v2045
  %v2062 = vmul.f32 %v1513, %v2046
  %v2063 = vmul.f32 %v1514, %v2047
  %v2064 = vmul.f32 %v1515, %v2048
  %v2065 = vmul.f32 %v1516, %v2049
  %v2066 = vmul.f32 %v1517, %v2050
  %v2067 = vmul.f32 %v1518, %v2051
  %v2068 = vmul.f32 %v1519, %v2052
  %v2069 = vmul.f32 %v1520, %v2053
  %v2070 = vmul.f32 %v1521, %v2054
  %v2071 = vmul.f32 %v1522, %v2055
  %v2072 = vmul.f32 %v1523, %v2056
  %v2073 = vmul.f32 %v1524, %v2057
  %v2074 = vmul.f32 %v1525, %v2058
  %v2075 = vmul.f32 %v1526, %v2043
  %v2076 = vmul.f32 %v1527, %v2044
  %v2077 = vmul.f32 %v1528, %v2045
  %v2078 = vmul.f32 %v1529, %v2046
  %v2079 = vmul.f32 %v1530, %v2047
  %v2080 = vmul.f32 %v1531, %v2048
  %v2081 = vmul.f32 %v1532, %v2049
  %v2082 = vmul.f32 %v1533, %v2050
  %v2083 = vmul.f32 %v1534, %v2051
  %v2084 = vmul.f32 %v1535, %v2052
  %v2085 = vmul.f32 %v1536, %v2053
  %v2086 = vmul.f32 %v1537, %v2054
  %v2087 = vmul.f32 %v1538, %v2055
  %v2088 = vmul.f32 %v1539, %v2056
  %v2089 = vmul.f32 %v1540, %v2057
  %v2090 = vmul.f32 %v1541, %v2058
  %v2091 = vmul.f32 %v1542, %v2043
  %v2092 = vmul.f32 %v1543, %v2044
  %v2093 = vmul.f32 %v1544, %v2045
  %v2094 = vmul.f32 %v1545, %v2046
  %v2095 = vmul.f32 %v1546, %v2047
  %v2096 = vmul.f32 %v1547, %v2048
  %v2097 = vmul.f32 %v1548, %v2049
  %v2098 = vmul.f32 %v1549, %v2050
  %v2099 = vmul.f32 %v1550, %v2051
  %v2100 = vmul.f32 %v1551, %v2052
  %v2101 = vmul.f32 %v1552, %v2053
  %v2102 = vmul.f32 %v1553, %v2054
  %v2103 = vmul.f32 %v1554, %v2055
  %v2104 = vmul.f32 %v1555, %v2056
  %v2105 = vmul.f32 %v1556, %v2057
  %v2106 = vmul.f32 %v1557, %v2058
  %v2107 = vmul.f32 %v1558, %v2043
  %v2108 = vmul.f32 %v1559, %v2044
  %v2109 = vmul.f32 %v1560, %v2045
  %v2110 = vmul.f32 %v1561, %v2046
  %v2111 = vmul.f32 %v1562, %v2047
  %v2112 = vmul.f32 %v1563, %v2048
  %v2113 = vmul.f32 %v1564, %v2049
  %v2114 = vmul.f32 %v1565, %v2050
  %v2115 = vmul.f32 %v1566, %v2051
  %v2116 = vmul.f32 %v1567, %v2052
  %v2117 = vmul.f32 %v1568, %v2053
  %v2118 = vmul.f32 %v1569, %v2054
  %v2119 = vmul.f32 %v1570, %v2055
  %v2120 = vmul.f32 %v1571, %v2056
  %v2121 = vmul.f32 %v1572, %v2057
  %v2122 = vmul.f32 %v1573, %v2058
  %v2123 = vmul.f32 %v1574, %v2043
  %v2124 = vmul.f32 %v1575, %v2044
  %v2125 = vmul.f32 %v1576, %v2045
  %v2126 = vmul.f32 %v1577, %v2046
  %v2127 = vmul.f32 %v1578, %v2047
  %v2128 = vmul.f32 %v1579, %v2048
  %v2129 = vmul.f32 %v1580, %v2049
  %v2130 = vmul.f32 %v1581, %v2050
  %v2131 = vmul.f32 %v1582, %v2051
  %v2132 = vmul.f32 %v1583, %v2052
  %v2133 = vmul.f32 %v1584, %v2053
  %v2134 = vmul.f32 %v1585, %v2054
  %v2135 = vmul.f32 %v1586, %v2055
  %v2136 = vmul.f32 %v1587, %v2056
  %v2137 = vmul.f32 %v1588, %v2057
  %v2138 = vmul.f32 %v1589, %v2058
  %v2139 = vmul.f32 %v1590, %v2043
  %v2140 = vmul.f32 %v1591, %v2044
  %v2141 = vmul.f32 %v1592, %v2045
  %v2142 = vmul.f32 %v1593, %v2046
  %v2143 = vmul.f32 %v1594, %v2047
  %v2144 = vmul.f32 %v1595, %v2048
  %v2145 = vmul.f32 %v1596, %v2049
  %v2146 = vmul.f32 %v1597, %v2050
  %v2147 = vmul.f32 %v1598, %v2051
  %v2148 = vmul.f32 %v1599, %v2052
  %v2149 = vmul.f32 %v1600, %v2053
  %v2150 = vmul.f32 %v1601, %v2054
  %v2151 = vmul.f32 %v1602, %v2055
  %v2152 = vmul.f32 %v1603, %v2056
  %v2153 = vmul.f32 %v1604, %v2057
  %v2154 = vmul.f32 %v1605, %v2058
  %v2155 = vmul.f32 %v1606, %v2043
  %v2156 = vmul.f32 %v1607, %v2044
  %v2157 = vmul.f32 %v1608, %v2045
  %v2158 = vmul.f32 %v1609, %v2046
  %v2159 = vmul.f32 %v1610, %v2047
  %v2160 = vmul.f32 %v1611, %v2048
  %v2161 = vmul.f32 %v1612, %v2049
  %v2162 = vmul.f32 %v1613, %v2050
  %v2163 = vmul.f32 %v1614, %v2051
  %v2164 = vmul.f32 %v1615, %v2052
  %v2165 = vmul.f32 %v1616, %v2053
  %v2166 = vmul.f32 %v1617, %v2054
  %v2167 = vmul.f32 %v1618, %v2055
  %v2168 = vmul.f32 %v1619, %v2056
  %v2169 = vmul.f32 %v1620, %v2057
  %v2170 = vmul.f32 %v1621, %v2058
  %v2171 = vmul.f32 %v1622, %v2043
  %v2172 = vmul.f32 %v1623, %v2044
  %v2173 = vmul.f32 %v1624, %v2045
  %v2174 = vmul.f32 %v1625, %v2046
  %v2175 = vmul.f32 %v1626, %v2047
  %v2176 = vmul.f32 %v1627, %v2048
  %v2177 = vmul.f32 %v1628, %v2049
  %v2178 = vmul.f32 %v1629, %v2050
  %v2179 = vmul.f32 %v1630, %v2051
  %v2180 = vmul.f32 %v1631, %v2052
  %v2181 = vmul.f32 %v1632, %v2053
  %v2182 = vmul.f32 %v1633, %v2054
  %v2183 = vmul.f32 %v1634, %v2055
  %v2184 = vmul.f32 %v1635, %v2056
  %v2185 = vmul.f32 %v1636, %v2057
  %v2186 = vmul.f32 %v1637, %v2058
  %v2187 = vadd.f32 %v2059, %v2061
  %v2188 = vadd.f32 %v2187, %v2063
  %v2189 = vadd.f32 %v2188, %v2065
  %v2190 = vadd.f32 %v2189, %v2067
  %v2191 = vadd.f32 %v2190, %v2069
  %v2192 = vadd.f32 %v2191, %v2071
  %v2193 = vadd.f32 %v2192, %v2073
  %v2194 = vrot.slane %v2193, 4
  %v2195 = vadd.f32 %v2193, %v2194
  %v2196 = vrot.slane %v2195, 2
  %v2197 = vadd.f32 %v2195, %v2196
  %v2198 = vrot.slane %v2197, 1
  %v2199 = vadd.f32 %v2197, %v2198
  %v2200 = vadd.f32 %v2060, %v2062
  %v2201 = vadd.f32 %v2200, %v2064
  %v2202 = vadd.f32 %v2201, %v2066
  %v2203 = vadd.f32 %v2202, %v2068
  %v2204 = vadd.f32 %v2203, %v2070
  %v2205 = vadd.f32 %v2204, %v2072
  %v2206 = vadd.f32 %v2205, %v2074
  %v2207 = vrot.slane %v2206, 4
  %v2208 = vadd.f32 %v2206, %v2207
  %v2209 = vrot.slane %v2208, 2
  %v2210 = vadd.f32 %v2208, %v2209
  %v2211 = vrot.slane %v2210, 1
  %v2212 = vadd.f32 %v2210, %v2211
  %v2213 = vadd.f32 %v2075, %v2077
  %v2214 = vadd.f32 %v2213, %v2079
  %v2215 = vadd.f32 %v2214, %v2081
  %v2216 = vadd.f32 %v2215, %v2083
  %v2217 = vadd.f32 %v2216, %v2085
  %v2218 = vadd.f32 %v2217, %v2087
  %v2219 = vadd.f32 %v2218, %v2089
  %v2220 = vrot.slane %v2219, 4
  %v2221 = vadd.f32 %v2219, %v2220
  %v2222 = vrot.slane %v2221, 2
  %v2223 = vadd.f32 %v2221, %v2222
  %v2224 = vrot.slane %v2223, 1
  %v2225 = vadd.f32 %v2223, %v2224
  %v2226 = vadd.f32 %v2076, %v2078
  %v2227 = vadd.f32 %v2226, %v2080
  %v2228 = vadd.f32 %v2227, %v2082
  %v2229 = vadd.f32 %v2228, %v2084
  %v2230 = vadd.f32 %v2229, %v2086
  %v2231 = vadd.f32 %v2230, %v2088
  %v2232 = vadd.f32 %v2231, %v2090
  %v2233 = vrot.slane %v2232, 4
  %v2234 = vadd.f32 %v2232, %v2233
  %v2235 = vrot.slane %v2234, 2
  %v2236 = vadd.f32 %v2234, %v2235
  %v2237 = vrot.slane %v2236, 1
  %v2238 = vadd.f32 %v2236, %v2237
  %v2239 = vadd.f32 %v2091, %v2093
  %v2240 = vadd.f32 %v2239, %v2095
  %v2241 = vadd.f32 %v2240, %v2097
  %v2242 = vadd.f32 %v2241, %v2099
  %v2243 = vadd.f32 %v2242, %v2101
  %v2244 = vadd.f32 %v2243, %v2103
  %v2245 = vadd.f32 %v2244, %v2105
  %v2246 = vrot.slane %v2245, 4
  %v2247 = vadd.f32 %v2245, %v2246
  %v2248 = vrot.slane %v2247, 2
  %v2249 = vadd.f32 %v2247, %v2248
  %v2250 = vrot.slane %v2249, 1
  %v2251 = vadd.f32 %v2249, %v2250
  %v2252 = vadd.f32 %v2092, %v2094
  %v2253 = vadd.f32 %v2252, %v2096
  %v2254 = vadd.f32 %v2253, %v2098
  %v2255 = vadd.f32 %v2254, %v2100
  %v2256 = vadd.f32 %v2255, %v2102
  %v2257 = vadd.f32 %v2256, %v2104
  %v2258 = vadd.f32 %v2257, %v2106
  %v2259 = vrot.slane %v2258, 4
  %v2260 = vadd.f32 %v2258, %v2259
  %v2261 = vrot.slane %v2260, 2
  %v2262 = vadd.f32 %v2260, %v2261
  %v2263 = vrot.slane %v2262, 1
  %v2264 = vadd.f32 %v2262, %v2263
  %v2265 = vadd.f32 %v2107, %v2109
  %v2266 = vadd.f32 %v2265, %v2111
  %v2267 = vadd.f32 %v2266, %v2113
  %v2268 = vadd.f32 %v2267, %v2115
  %v2269 = vadd.f32 %v2268, %v2117
  %v2270 = vadd.f32 %v2269, %v2119
  %v2271 = vadd.f32 %v2270, %v2121
  %v2272 = vrot.slane %v2271, 4
  %v2273 = vadd.f32 %v2271, %v2272
  %v2274 = vrot.slane %v2273, 2
  %v2275 = vadd.f32 %v2273, %v2274
  %v2276 = vrot.slane %v2275, 1
  %v2277 = vadd.f32 %v2275, %v2276
  %v2278 = vadd.f32 %v2108, %v2110
  %v2279 = vadd.f32 %v2278, %v2112
  %v2280 = vadd.f32 %v2279, %v2114
  %v2281 = vadd.f32 %v2280, %v2116
  %v2282 = vadd.f32 %v2281, %v2118
  %v2283 = vadd.f32 %v2282, %v2120
  %v2284 = vadd.f32 %v2283, %v2122
  %v2285 = vrot.slane %v2284, 4
  %v2286 = vadd.f32 %v2284, %v2285
  %v2287 = vrot.slane %v2286, 2
  %v2288 = vadd.f32 %v2286, %v2287
  %v2289 = vrot.slane %v2288, 1
  %v2290 = vadd.f32 %v2288, %v2289
  %v2291 = vadd.f32 %v2123, %v2125
  %v2292 = vadd.f32 %v2291, %v2127
  %v2293 = vadd.f32 %v2292, %v2129
  %v2294 = vadd.f32 %v2293, %v2131
  %v2295 = vadd.f32 %v2294, %v2133
  %v2296 = vadd.f32 %v2295, %v2135
  %v2297 = vadd.f32 %v2296, %v2137
  %v2298 = vrot.slane %v2297, 4
  %v2299 = vadd.f32 %v2297, %v2298
  %v2300 = vrot.slane %v2299, 2
  %v2301 = vadd.f32 %v2299, %v2300
  %v2302 = vrot.slane %v2301, 1
  %v2303 = vadd.f32 %v2301, %v2302
  %v2304 = vadd.f32 %v2124, %v2126
  %v2305 = vadd.f32 %v2304, %v2128
  %v2306 = vadd.f32 %v2305, %v2130
  %v2307 = vadd.f32 %v2306, %v2132
  %v2308 = vadd.f32 %v2307, %v2134
  %v2309 = vadd.f32 %v2308, %v2136
  %v2310 = vadd.f32 %v2309, %v2138
  %v2311 = vrot.slane %v2310, 4
  %v2312 = vadd.f32 %v2310, %v2311
  %v2313 = vrot.slane %v2312, 2
  %v2314 = vadd.f32 %v2312, %v2313
  %v2315 = vrot.slane %v2314, 1
  %v2316 = vadd.f32 %v2314, %v2315
  %v2317 = vadd.f32 %v2139, %v2141
  %v2318 = vadd.f32 %v2317, %v2143
  %v2319 = vadd.f32 %v2318, %v2145
  %v2320 = vadd.f32 %v2319, %v2147
  %v2321 = vadd.f32 %v2320, %v2149
  %v2322 = vadd.f32 %v2321, %v2151
  %v2323 = vadd.f32 %v2322, %v2153
  %v2324 = vrot.slane %v2323, 4
  %v2325 = vadd.f32 %v2323, %v2324
  %v2326 = vrot.slane %v2325, 2
  %v2327 = vadd.f32 %v2325, %v2326
  %v2328 = vrot.slane %v2327, 1
  %v2329 = vadd.f32 %v2327, %v2328
  %v2330 = vadd.f32 %v2140, %v2142
  %v2331 = vadd.f32 %v2330, %v2144
  %v2332 = vadd.f32 %v2331, %v2146
  %v2333 = vadd.f32 %v2332, %v2148
  %v2334 = vadd.f32 %v2333, %v2150
  %v2335 = vadd.f32 %v2334, %v2152
  %v2336 = vadd.f32 %v2335, %v2154
  %v2337 = vrot.slane %v2336, 4
  %v2338 = vadd.f32 %v2336, %v2337
  %v2339 = vrot.slane %v2338, 2
  %v2340 = vadd.f32 %v2338, %v2339
  %v2341 = vrot.slane %v2340, 1
  %v2342 = vadd.f32 %v2340, %v2341
  %v2343 = vadd.f32 %v2155, %v2157
  %v2344 = vadd.f32 %v2343, %v2159
  %v2345 = vadd.f32 %v2344, %v2161
  %v2346 = vadd.f32 %v2345, %v2163
  %v2347 = vadd.f32 %v2346, %v2165
  %v2348 = vadd.f32 %v2347, %v2167
  %v2349 = vadd.f32 %v2348, %v2169
  %v2350 = vrot.slane %v2349, 4
  %v2351 = vadd.f32 %v2349, %v2350
  %v2352 = vrot.slane %v2351, 2
  %v2353 = vadd.f32 %v2351, %v2352
  %v2354 = vrot.slane %v2353, 1
  %v2355 = vadd.f32 %v2353, %v2354
  %v2356 = vadd.f32 %v2156, %v2158
  %v2357 = vadd.f32 %v2356, %v2160
  %v2358 = vadd.f32 %v2357, %v2162
  %v2359 = vadd.f32 %v2358, %v2164
  %v2360 = vadd.f32 %v2359, %v2166
  %v2361 = vadd.f32 %v2360, %v2168
  %v2362 = vadd.f32 %v2361, %v2170
  %v2363 = vrot.slane %v2362, 4
  %v2364 = vadd.f32 %v2362, %v2363
  %v2365 = vrot.slane %v2364, 2
  %v2366 = vadd.f32 %v2364, %v2365
  %v2367 = vrot.slane %v2366, 1
  %v2368 = vadd.f32 %v2366, %v2367
  %v2369 = vadd.f32 %v2171, %v2173
  %v2370 = vadd.f32 %v2369, %v2175
  %v2371 = vadd.f32 %v2370, %v2177
  %v2372 = vadd.f32 %v2371, %v2179
  %v2373 = vadd.f32 %v2372, %v2181
  %v2374 = vadd.f32 %v2373, %v2183
  %v2375 = vadd.f32 %v2374, %v2185
  %v2376 = vrot.slane %v2375, 4
  %v2377 = vadd.f32 %v2375, %v2376
  %v2378 = vrot.slane %v2377, 2
  %v2379 = vadd.f32 %v2377, %v2378
  %v2380 = vrot.slane %v2379, 1
  %v2381 = vadd.f32 %v2379, %v2380
  %v2382 = vadd.f32 %v2172, %v2174
  %v2383 = vadd.f32 %v2382, %v2176
  %v2384 = vadd.f32 %v2383, %v2178
  %v2385 = vadd.f32 %v2384, %v2180
  %v2386 = vadd.f32 %v2385, %v2182
  %v2387 = vadd.f32 %v2386, %v2184
  %v2388 = vadd.f32 %v2387, %v2186
  %v2389 = vrot.slane %v2388, 4
  %v2390 = vadd.f32 %v2388, %v2389
  %v2391 = vrot.slane %v2390, 2
  %v2392 = vadd.f32 %v2390, %v2391
  %v2393 = vrot.slane %v2392, 1
  %v2394 = vadd.f32 %v2392, %v2393
  %v2411 = vsel %vm2006, %v2225, %v2199
  %v2412 = vsel %vm2008, %v2251, %v2411
  %v2413 = vsel %vm2010, %v2277, %v2412
  %v2414 = vsel %vm2012, %v2303, %v2413
  %v2415 = vsel %vm2014, %v2329, %v2414
  %v2416 = vsel %vm2016, %v2355, %v2415
  %v2417 = vsel %vm2018, %v2381, %v2416
  %v2418 = vsel %vm2006, %v2238, %v2212
  %v2419 = vsel %vm2008, %v2264, %v2418
  %v2420 = vsel %vm2010, %v2290, %v2419
  %v2421 = vsel %vm2012, %v2316, %v2420
  %v2422 = vsel %vm2014, %v2342, %v2421
  %v2423 = vsel %vm2016, %v2368, %v2422
  %v2424 = vsel %vm2018, %v2394, %v2423
  %v2427 = vadd.f32 %v2417, %v2424
  %2428 = vadd.xlane.f32.xlu0 %v2427
  %v2429 = vpop.xlane.xlu0 %2428
  %v2430 = vld [vmem:[%s6] sm:$0x1]
  %v2432 = vlaneseq
  %v2433 = vshrl.u32 %v2432, 7
  %v2434 = vsub.s32 0, %v2433
  %v2435 = vrot.slane %v2430, %v2434
  %v2437 = vadd.f32 %v2429, %v2435
  %vm2438 = vcmask 15368
  %2439 = vst.msk [vmem:[%s7] sm:$0xff] %vm2438, %v2437
  // Predicated region
  $region30: #{model_forward.1} parent=0 // pred_check
    _
  $region31: #{model_forward.1} parent=0 // pred_check_branch
    %2441 = sbr.rel (0) target = $region33
  $region32: #{model_forward.1} parent=0 // pred_region
    _
  $region33: #{model_forward.1} parent=0 // pred_fallthru
    _
  // Predicated region
  $region34: #{model_forward.1} parent=0 // pred_check
    _
  $region35: #{model_forward.1} parent=0 // pred_check_branch
    %2443 = sbr.rel (0) target = $region37
  $region36: #{model_forward.1} parent=0 // pred_region
    _
  $region37: #{model_forward.1} parent=0 // pred_fallthru
    _

</llo_original>
